<compile_context>
chip_gen: v7x
topology: tpu7x:2x2x1
jax: 0.10.0
libtpu: 0.0.40
codegen_flags: <defaults>
</compile_context>

<pallas_src>
import functools

import jax
import jax.numpy as jnp
from jax.experimental import pallas as pl
from jax.experimental.pallas import tpu as pltpu


def _round_up(a, b):
    return ((a + b - 1) // b) * b


def _cdiv(a, b):
    return (a + b - 1) // b


def _erf_approx(x):
    # TODO(synk): erf has no native Pallas/Mosaic lowering; PyTorch's exact (erf-based)
    # nn.GELU is realized with the Abramowitz & Stegun 7.1.26 polynomial
    # (max abs err ~1.5e-7, i.e. f32-level accuracy).  Only used on the strict f32
    # path, so the divide stays exact to preserve the polynomial's accuracy.
    p = 0.3275911
    a1, a2, a3, a4, a5 = (0.254829592, -0.284496736, 1.421413741,
                          -1.453152027, 1.061405429)
    ax = jnp.abs(x)
    t = 1.0 / (1.0 + p * ax)
    poly = ((((a5 * t + a4) * t + a3) * t + a2) * t + a1) * t
    y = 1.0 - poly * jnp.exp(-ax * ax)            # exp goes to the EUP slot
    return jnp.where(x < 0.0, -y, y)


def _gelu_exact(x):
    # Strict-precision GELU (matches torch's erf-based nn.GELU to f32 level).
    return 0.5 * x * (1.0 + _erf_approx(x * 0.7071067811865476))


def _gelu_tanh(x):
    # Fast-path GELU: tanh form.  The transcendental lands on the EUP slot, leaving
    # only ~8 VALU ops/element (vs ~20 for the erf polynomial), which was the
    # saturating slot of this kernel on all generations.
    inner = 0.7978845608028654 * (x + 0.044715 * (x * x * x))
    return 0.5 * x * (1.0 + jnp.tanh(inner))


def _layer_norm(h, gamma, beta, eps=1e-5):
    mu = jnp.mean(h, axis=-1, keepdims=True)
    xc = h - mu
    var = jnp.mean(xc * xc, axis=-1, keepdims=True)
    return xc * jax.lax.rsqrt(var + eps) * gamma + beta


def _one2zero_kernel(edges_ref, x_ref,
                     w1_ref, b1_ref, g1_ref, be1_ref,
                     w2_ref, b2_ref, g2_ref, be2_ref,
                     w3r_ref, b3r_ref,
                     xproj_ref, ssum_ref,
                     out_ref, *, rep_cols, pad_rep, mlp_dtype, fast_gelu):
    f32 = jnp.float32
    gelu = _gelu_tanh if fast_gelu else _gelu_exact

    # ---- PairwiseKernel MLP: Linear -> LayerNorm -> GELU -> Linear -> LN -> GELU -> Linear
    # MXU operands in `mlp_dtype` (bf16 on the fast path), f32 accumulation;
    # LayerNorm / GELU math stays in f32 on the VPU/EUP.  Inputs arrive in their
    # producer dtype and are cast here (no standalone HBM cast pass).
    e = edges_ref[...].astype(mlp_dtype)
    h = jnp.dot(e, w1_ref[...], preferred_element_type=f32) + b1_ref[...]
    h = gelu(_layer_norm(h, g1_ref[...], be1_ref[...]))
    h = jnp.dot(h.astype(mlp_dtype), w2_ref[...], preferred_element_type=f32) + b2_ref[...]
    h = gelu(_layer_norm(h, g2_ref[...], be2_ref[...]))
    # Widened last Linear: column (o*c_in + i)*d + dd of w3r equals column (o*c_in + i)
    # of the original w3, so k_rep[m, (o,i,dd)] is the (o,i) kernel entry replicated
    # over d -- no in-kernel identity/repeat matmuls are needed.
    k_rep = (jnp.dot(h.astype(mlp_dtype), w3r_ref[...], preferred_element_type=f32)
             + b3r_ref[...])                                   # (TM, c_out*c_in*d)

    # ---- type-1 contraction, all d spatial components fused:
    #   x_rep [m,(o,i,dd)] = x[m,i,dd]                       (x replicated over o)
    #   lt_rep[m,(o,i,dd)] = sum_i' trans[o,i'] * x[m,i',dd] (trans@x replicated over i)
    # Both come from ONE constant (c_in*d, pad_rep + rep_cols) matmul whose lt_rep
    # block starts at lane `pad_rep` (a 128-lane boundary), so both slices below are
    # lane-aligned (no XLU relayout).  The final sum over (i, dd) is one constant
    # (rep_cols, c_out) selector matmul.
    x = x_ref[...].astype(f32)                                 # (TM, c_in*d), native order
    xp = jnp.dot(x, xproj_ref[...], preferred_element_type=f32)
    x_rep = xp[:, :rep_cols]
    lt_rep = xp[:, pad_rep:]
    prod = k_rep * x_rep * lt_rep                              # VPU
    out = jnp.dot(prod, ssum_ref[...], preferred_element_type=f32)
    out_ref[...] = out.astype(out_ref.dtype)


def one2zero_pallas(x, edges, params, *, tile_m=512, mlp_dtype=jnp.bfloat16):
    """One2Zero forward.  mlp_dtype=jnp.bfloat16 (default) feeds the MXU bf16
    operands with f32 accumulation and uses the tanh-form GELU (fast path on
    v5e/v6e/v7x); pass jnp.float32 for strict f32 matmuls + exact-erf GELU."""
    f32 = jnp.float32
    B, N, _, c_in, d = x.shape
    E = edges.shape[-1]
    c_out, _ = params["trans"].shape
    M = B * N * N
    rep_cols = c_out * c_in * d
    pad_rep = _round_up(rep_cols, 128)        # lane-aligned start for the lt_rep block
    fast_gelu = jnp.dtype(mlp_dtype) != jnp.dtype(jnp.float32)

    # Stream edges / x in their producer dtype: the reshapes below are free
    # metadata ops, so there is no extra HBM read+write for casting or padding.
    edges_f = edges.reshape(M, E)
    x_f = x.reshape(M, c_in * d)

    # Big tiles amortize the ~0.35us per-grid-step overhead, but always leave >=2 grid
    # steps so both v7x TensorCores get work via dimension_semantics=("parallel",).
    # Ragged last tile: OOB reads produce garbage only in rows whose writes Pallas
    # masks, and no reduction crosses rows.  (If tile_m is raised past ~1024, set
    # vmem_limit_bytes explicitly -- v7x has only 32 MiB scoped / 64 MiB physical VMEM.)
    tile_m = max(8, _round_up(min(tile_m, _cdiv(M, 2)), 8))
    grid_m = _cdiv(M, tile_m)

    def row(v):
        return v.reshape(1, -1).astype(f32)

    trans = params["trans"].astype(f32)
    w1 = params["w1"].astype(mlp_dtype)
    w2 = params["w2"].astype(mlp_dtype)
    # Widen the final Linear so the per-edge kernel is emitted pre-replicated over d
    # (layout (o, i, dd)); the widened N stays <= 128, so it is free on the MXU.
    w3r = jnp.repeat(params["w3"].astype(f32), d, axis=1).astype(mlp_dtype)
    b3r = jnp.repeat(params["b3"].astype(f32), d).reshape(1, -1)

    # Constant x-side projections, fused into a single (c_in*d, pad_rep + rep_cols)
    # matmul.  The REP block (x replicated across c_out) is zero-padded to pad_rep
    # columns so the WLT block (trans @ x replicated over i) starts on a 128-lane
    # boundary, making both in-kernel slices lane-aligned.
    eye_cd = jnp.eye(c_in * d, dtype=f32)
    rep = jnp.tile(eye_cd, (1, c_out))                                   # (c_in*d, rep_cols)
    rep = jnp.pad(rep, ((0, 0), (0, pad_rep - rep_cols)))                # (c_in*d, pad_rep)
    eye_d = jnp.eye(d, dtype=f32)
    wlt = trans.T[:, None, :, None, None] * eye_d[None, :, None, None, :]
    wlt = jnp.broadcast_to(wlt, (c_in, d, c_out, c_in, d)).reshape(c_in * d, rep_cols)
    xproj_w = jnp.concatenate([rep, wlt], axis=1)                        # (c_in*d, pad_rep+rep_cols)
    ssum = jnp.repeat(jnp.eye(c_out, dtype=f32), c_in * d, axis=0)       # (rep_cols, c_out)

    small = [w1, row(params["b1"]), row(params["g1"]), row(params["be1"]),
             w2, row(params["b2"]), row(params["g2"]), row(params["be2"]),
             w3r, b3r, xproj_w, ssum]

    in_specs = [pl.BlockSpec((tile_m, E), lambda i: (i, 0)),
                pl.BlockSpec((tile_m, c_in * d), lambda i: (i, 0))]
    in_specs += [pl.BlockSpec(p.shape, lambda i: (0, 0)) for p in small]

    out = pl.pallas_call(
        functools.partial(_one2zero_kernel, rep_cols=rep_cols, pad_rep=pad_rep,
                          mlp_dtype=mlp_dtype, fast_gelu=fast_gelu),
        out_shape=jax.ShapeDtypeStruct((M, c_out), f32),
        grid_spec=pltpu.PrefetchScalarGridSpec(
            num_scalar_prefetch=0,
            grid=(grid_m,),
            in_specs=in_specs,
            out_specs=pl.BlockSpec((tile_m, c_out), lambda i: (i, 0)),
        ),
        compiler_params=pltpu.CompilerParams(
            dimension_semantics=("parallel",)),   # shards across v7x's 2 TensorCores
    )(edges_f, x_f, *small)

    return out.reshape(B, N, N, c_out, 1)


def one2zero_ref(x, edges, params):
    """Pure-JAX reference mirroring the PyTorch forward (exact GELU, f32 HIGHEST)."""
    hp = jax.lax.Precision.HIGHEST

    def ln(h, g, b, eps=1e-5):
        mu = jnp.mean(h, axis=-1, keepdims=True)
        var = jnp.mean((h - mu) ** 2, axis=-1, keepdims=True)
        return (h - mu) / jnp.sqrt(var + eps) * g + b

    h = jnp.dot(edges, params["w1"], precision=hp) + params["b1"]
    h = jax.nn.gelu(ln(h, params["g1"], params["be1"]), approximate=False)
    h = jnp.dot(h, params["w2"], precision=hp) + params["b2"]
    h = jax.nn.gelu(ln(h, params["g2"], params["be2"]), approximate=False)
    k = jnp.dot(h, params["w3"], precision=hp) + params["b3"]

    c_out, c_in = params["trans"].shape
    kernels = k.reshape(*k.shape[:-1], c_out, c_in)
    edge_t = jnp.einsum("...oi,...id->...od", kernels, x, precision=hp)
    lin_t = jnp.einsum("oi,...id->...od", params["trans"], x, precision=hp)
    return jnp.sum(edge_t * lin_t, axis=-1, keepdims=True)


if __name__ == "__main__":
    B, N = 2, 8
    c_in, c_out, d = 4, 4, 3
    edge_dim, mid_dim = 32, 128
    init_eps = 0.001

    key = jax.random.PRNGKey(0)
    ks = jax.random.split(key, 9)

    def lin_w(kk, fan_in, fan_out):
        bound = 1.0 / (fan_in ** 0.5)
        return jax.random.uniform(kk, (fan_in, fan_out), jnp.float32, -bound, bound)

    params = {
        "w1": lin_w(ks[0], edge_dim, mid_dim),
        "b1": jax.random.uniform(ks[1], (mid_dim,), jnp.float32, -0.05, 0.05),
        "g1": jnp.ones((mid_dim,), jnp.float32),
        "be1": jnp.zeros((mid_dim,), jnp.float32),
        "w2": lin_w(ks[2], mid_dim, mid_dim),
        "b2": jax.random.uniform(ks[3], (mid_dim,), jnp.float32, -0.05, 0.05),
        "g2": jnp.ones((mid_dim,), jnp.float32),
        "be2": jnp.zeros((mid_dim,), jnp.float32),
        "w3": lin_w(ks[4], mid_dim, c_out * c_in),
        "b3": jax.random.uniform(ks[5], (c_out * c_in,), jnp.float32, -0.05, 0.05),
        "trans": init_eps * jax.random.normal(ks[6], (c_out, c_in), jnp.float32),
    }

    x = jax.random.normal(ks[7], (B, N, N, c_in, d), jnp.float32)
    edges = jax.random.normal(ks[8], (B, N, N, edge_dim), jnp.float32)

    ref = one2zero_ref(x, edges, params)

    # Strict-precision path: f32 MXU operands + exact-erf GELU; matches the
    # erf-based torch forward to f32-level tolerance.
    out_f32 = jax.block_until_ready(
        one2zero_pallas(x, edges, params, mlp_dtype=jnp.float32))
    assert out_f32.shape == (B, N, N, c_out, 1), out_f32.shape
    err_f32 = float(jnp.max(jnp.abs(out_f32 - ref)))
    assert jnp.allclose(out_f32, ref, atol=2e-4, rtol=2e-4), err_f32

    # Fast path (default): bf16 MXU operands with f32 accumulation + tanh-form GELU.
    # Tolerance reflects bf16 operand rounding (~2^-8 relative) propagated through
    # the 3-layer MLP (the tanh-GELU approximation error is far below that); the
    # output scale is ~init_eps so absolute errors stay small.
    out_bf16 = jax.block_until_ready(one2zero_pallas(x, edges, params))
    err_bf16 = float(jnp.max(jnp.abs(out_bf16 - ref)))
    assert jnp.allclose(out_bf16, ref, atol=2e-3, rtol=2e-2), err_bf16

    print("KERNEL_OK")
</pallas_src>

<mosaic_0001>
module attributes {stable_mosaic.version = 11 : i64} {
  func.func @_one2zero_kernel(%arg0: i32, %arg1: memref<64x32xf32, #tpu.memory_space<vmem>>, %arg2: memref<64x12xf32, #tpu.memory_space<vmem>>, %arg3: memref<32x128xf32, #tpu.memory_space<vmem>>, %arg4: memref<1x128xf32, #tpu.memory_space<vmem>>, %arg5: memref<1x128xf32, #tpu.memory_space<vmem>>, %arg6: memref<1x128xf32, #tpu.memory_space<vmem>>, %arg7: memref<128x128xf32, #tpu.memory_space<vmem>>, %arg8: memref<1x128xf32, #tpu.memory_space<vmem>>, %arg9: memref<1x128xf32, #tpu.memory_space<vmem>>, %arg10: memref<1x128xf32, #tpu.memory_space<vmem>>, %arg11: memref<128x48xf32, #tpu.memory_space<vmem>>, %arg12: memref<1x48xf32, #tpu.memory_space<vmem>>, %arg13: memref<12x176xf32, #tpu.memory_space<vmem>>, %arg14: memref<48x4xf32, #tpu.memory_space<vmem>>, %arg15: memref<64x4xf32, #tpu.memory_space<vmem>>) attributes {dimension_semantics = [#tpu.dimension_semantics<parallel>], iteration_bounds = array<i64: 2>, scalar_prefetch = 0 : i64, scratch_operands = 0 : i64, tpu.core_type = #tpu.core_type<tc>, window_params = [{transform_indices = @transform_0, window_bounds = array<i64: 64, 32>}, {transform_indices = @transform_1, window_bounds = array<i64: 64, 12>}, {pipeline_mode = #tpu.pipeline_mode<synchronous>, transform_indices = @transform_2, window_bounds = array<i64: 32, 128>}, {pipeline_mode = #tpu.pipeline_mode<synchronous>, transform_indices = @transform_3, window_bounds = array<i64: 1, 128>}, {pipeline_mode = #tpu.pipeline_mode<synchronous>, transform_indices = @transform_4, window_bounds = array<i64: 1, 128>}, {pipeline_mode = #tpu.pipeline_mode<synchronous>, transform_indices = @transform_5, window_bounds = array<i64: 1, 128>}, {pipeline_mode = #tpu.pipeline_mode<synchronous>, transform_indices = @transform_6, window_bounds = array<i64: 128, 128>}, {pipeline_mode = #tpu.pipeline_mode<synchronous>, transform_indices = @transform_7, window_bounds = array<i64: 1, 128>}, {pipeline_mode = #tpu.pipeline_mode<synchronous>, transform_indices = @transform_8, window_bounds = array<i64: 1, 128>}, {pipeline_mode = #tpu.pipeline_mode<synchronous>, transform_indices = @transform_9, window_bounds = array<i64: 1, 128>}, {pipeline_mode = #tpu.pipeline_mode<synchronous>, transform_indices = @transform_10, window_bounds = array<i64: 128, 48>}, {pipeline_mode = #tpu.pipeline_mode<synchronous>, transform_indices = @transform_11, window_bounds = array<i64: 1, 48>}, {pipeline_mode = #tpu.pipeline_mode<synchronous>, transform_indices = @transform_12, window_bounds = array<i64: 12, 176>}, {pipeline_mode = #tpu.pipeline_mode<synchronous>, transform_indices = @transform_13, window_bounds = array<i64: 48, 4>}, {transform_indices = @transform_14, window_bounds = array<i64: 64, 4>}]} {
    %c0 = arith.constant 0 : index
    %c0_0 = arith.constant 0 : index
    %0 = vector.load %arg1[%c0, %c0_0] : memref<64x32xf32, #tpu.memory_space<vmem>>, vector<64x32xf32>
    %c0_1 = arith.constant 0 : index
    %c0_2 = arith.constant 0 : index
    %1 = vector.load %arg3[%c0_1, %c0_2] : memref<32x128xf32, #tpu.memory_space<vmem>>, vector<32x128xf32>
    %cst = arith.constant dense<0.000000e+00> : vector<64x128xf32>
    %2 = tpu.matmul %0, %1, %cst {dimension_numbers = #tpu.dot_dimension_numbers<[1], [0], [0], [1], [0, 0, 1, 1], [], []>} : vector<64x32xf32>, vector<32x128xf32>, vector<64x128xf32> -> vector<64x128xf32>
    %c0_3 = arith.constant 0 : index
    %c0_4 = arith.constant 0 : index
    %3 = vector.load %arg4[%c0_3, %c0_4] : memref<1x128xf32, #tpu.memory_space<vmem>>, vector<1x128xf32>
    %4 = vector.broadcast %3 : vector<1x128xf32> to vector<64x128xf32>
    %5 = arith.addf %2, %4 : vector<64x128xf32>
    %c0_5 = arith.constant 0 : index
    %c0_6 = arith.constant 0 : index
    %6 = vector.load %arg5[%c0_5, %c0_6] : memref<1x128xf32, #tpu.memory_space<vmem>>, vector<1x128xf32>
    %c0_7 = arith.constant 0 : index
    %c0_8 = arith.constant 0 : index
    %7 = vector.load %arg6[%c0_7, %c0_8] : memref<1x128xf32, #tpu.memory_space<vmem>>, vector<1x128xf32>
    %cst_9 = arith.constant dense<0.000000e+00> : vector<64xf32>
    %8 = vector.multi_reduction <add>, %5, %cst_9 [1] : vector<64x128xf32> to vector<64xf32>
    %9 = vector.shape_cast %8 : vector<64xf32> to vector<64x1xf32>
    %cst_10 = arith.constant 1.280000e+02 : f32
    %10 = vector.broadcast %cst_10 : f32 to vector<64x1xf32>
    %11 = arith.divf %9, %10 : vector<64x1xf32>
    %12 = vector.broadcast %11 : vector<64x1xf32> to vector<64x128xf32>
    %13 = arith.subf %5, %12 : vector<64x128xf32>
    %14 = arith.mulf %13, %13 : vector<64x128xf32>
    %cst_11 = arith.constant dense<0.000000e+00> : vector<64xf32>
    %15 = vector.multi_reduction <add>, %14, %cst_11 [1] : vector<64x128xf32> to vector<64xf32>
    %16 = vector.shape_cast %15 : vector<64xf32> to vector<64x1xf32>
    %cst_12 = arith.constant 1.280000e+02 : f32
    %17 = vector.broadcast %cst_12 : f32 to vector<64x1xf32>
    %18 = arith.divf %16, %17 : vector<64x1xf32>
    %cst_13 = arith.constant 9.99999974E-6 : f32
    %19 = vector.broadcast %cst_13 : f32 to vector<64x1xf32>
    %20 = arith.addf %18, %19 : vector<64x1xf32>
    %21 = math.rsqrt %20 : vector<64x1xf32>
    %22 = vector.broadcast %21 : vector<64x1xf32> to vector<64x128xf32>
    %23 = arith.mulf %13, %22 : vector<64x128xf32>
    %24 = vector.broadcast %6 : vector<1x128xf32> to vector<64x128xf32>
    %25 = arith.mulf %23, %24 : vector<64x128xf32>
    %26 = vector.broadcast %7 : vector<1x128xf32> to vector<64x128xf32>
    %27 = arith.addf %25, %26 : vector<64x128xf32>
    %cst_14 = arith.constant 5.000000e-01 : f32
    %28 = vector.broadcast %cst_14 : f32 to vector<64x128xf32>
    %29 = arith.mulf %28, %27 : vector<64x128xf32>
    %cst_15 = arith.constant 0.707106769 : f32
    %30 = vector.broadcast %cst_15 : f32 to vector<64x128xf32>
    %31 = arith.mulf %27, %30 : vector<64x128xf32>
    %32 = math.absf %31 : vector<64x128xf32>
    %cst_16 = arith.constant 0.327591091 : f32
    %33 = vector.broadcast %cst_16 : f32 to vector<64x128xf32>
    %34 = arith.mulf %33, %32 : vector<64x128xf32>
    %cst_17 = arith.constant 1.000000e+00 : f32
    %35 = vector.broadcast %cst_17 : f32 to vector<64x128xf32>
    %36 = arith.addf %35, %34 : vector<64x128xf32>
    %cst_18 = arith.constant 1.000000e+00 : f32
    %37 = vector.broadcast %cst_18 : f32 to vector<64x128xf32>
    %38 = arith.divf %37, %36 : vector<64x128xf32>
    %cst_19 = arith.constant 1.06140542 : f32
    %39 = vector.broadcast %cst_19 : f32 to vector<64x128xf32>
    %40 = arith.mulf %39, %38 : vector<64x128xf32>
    %cst_20 = arith.constant -1.45315206 : f32
    %41 = vector.broadcast %cst_20 : f32 to vector<64x128xf32>
    %42 = arith.addf %40, %41 : vector<64x128xf32>
    %43 = arith.mulf %42, %38 : vector<64x128xf32>
    %cst_21 = arith.constant 1.42141378 : f32
    %44 = vector.broadcast %cst_21 : f32 to vector<64x128xf32>
    %45 = arith.addf %43, %44 : vector<64x128xf32>
    %46 = arith.mulf %45, %38 : vector<64x128xf32>
    %cst_22 = arith.constant -0.284496725 : f32
    %47 = vector.broadcast %cst_22 : f32 to vector<64x128xf32>
    %48 = arith.addf %46, %47 : vector<64x128xf32>
    %49 = arith.mulf %48, %38 : vector<64x128xf32>
    %cst_23 = arith.constant 0.254829586 : f32
    %50 = vector.broadcast %cst_23 : f32 to vector<64x128xf32>
    %51 = arith.addf %49, %50 : vector<64x128xf32>
    %52 = arith.mulf %51, %38 : vector<64x128xf32>
    %cst_24 = arith.constant 0.000000e+00 : f32
    %53 = vector.broadcast %cst_24 : f32 to vector<64x128xf32>
    %54 = arith.subf %53, %32 : vector<64x128xf32>
    %55 = arith.mulf %54, %32 : vector<64x128xf32>
    %56 = math.exp %55 : vector<64x128xf32>
    %57 = arith.mulf %52, %56 : vector<64x128xf32>
    %cst_25 = arith.constant 1.000000e+00 : f32
    %58 = vector.broadcast %cst_25 : f32 to vector<64x128xf32>
    %59 = arith.subf %58, %57 : vector<64x128xf32>
    %cst_26 = arith.constant 0.000000e+00 : f32
    %60 = vector.broadcast %cst_26 : f32 to vector<64x128xf32>
    %61 = arith.cmpf olt, %31, %60 : vector<64x128xf32>
    %cst_27 = arith.constant 0.000000e+00 : f32
    %62 = vector.broadcast %cst_27 : f32 to vector<64x128xf32>
    %63 = arith.subf %62, %59 : vector<64x128xf32>
    %64 = arith.select %61, %63, %59 : vector<64x128xi1>, vector<64x128xf32>
    %cst_28 = arith.constant 1.000000e+00 : f32
    %65 = vector.broadcast %cst_28 : f32 to vector<64x128xf32>
    %66 = arith.addf %65, %64 : vector<64x128xf32>
    %67 = arith.mulf %29, %66 : vector<64x128xf32>
    %c0_29 = arith.constant 0 : index
    %c0_30 = arith.constant 0 : index
    %68 = vector.load %arg7[%c0_29, %c0_30] : memref<128x128xf32, #tpu.memory_space<vmem>>, vector<128x128xf32>
    %cst_31 = arith.constant dense<0.000000e+00> : vector<64x128xf32>
    %69 = tpu.matmul %67, %68, %cst_31 {dimension_numbers = #tpu.dot_dimension_numbers<[1], [0], [0], [1], [0, 0, 1, 1], [], []>} : vector<64x128xf32>, vector<128x128xf32>, vector<64x128xf32> -> vector<64x128xf32>
    %c0_32 = arith.constant 0 : index
    %c0_33 = arith.constant 0 : index
    %70 = vector.load %arg8[%c0_32, %c0_33] : memref<1x128xf32, #tpu.memory_space<vmem>>, vector<1x128xf32>
    %71 = vector.broadcast %70 : vector<1x128xf32> to vector<64x128xf32>
    %72 = arith.addf %69, %71 : vector<64x128xf32>
    %c0_34 = arith.constant 0 : index
    %c0_35 = arith.constant 0 : index
    %73 = vector.load %arg9[%c0_34, %c0_35] : memref<1x128xf32, #tpu.memory_space<vmem>>, vector<1x128xf32>
    %c0_36 = arith.constant 0 : index
    %c0_37 = arith.constant 0 : index
    %74 = vector.load %arg10[%c0_36, %c0_37] : memref<1x128xf32, #tpu.memory_space<vmem>>, vector<1x128xf32>
    %cst_38 = arith.constant dense<0.000000e+00> : vector<64xf32>
    %75 = vector.multi_reduction <add>, %72, %cst_38 [1] : vector<64x128xf32> to vector<64xf32>
    %76 = vector.shape_cast %75 : vector<64xf32> to vector<64x1xf32>
    %cst_39 = arith.constant 1.280000e+02 : f32
    %77 = vector.broadcast %cst_39 : f32 to vector<64x1xf32>
    %78 = arith.divf %76, %77 : vector<64x1xf32>
    %79 = vector.broadcast %78 : vector<64x1xf32> to vector<64x128xf32>
    %80 = arith.subf %72, %79 : vector<64x128xf32>
    %81 = arith.mulf %80, %80 : vector<64x128xf32>
    %cst_40 = arith.constant dense<0.000000e+00> : vector<64xf32>
    %82 = vector.multi_reduction <add>, %81, %cst_40 [1] : vector<64x128xf32> to vector<64xf32>
    %83 = vector.shape_cast %82 : vector<64xf32> to vector<64x1xf32>
    %cst_41 = arith.constant 1.280000e+02 : f32
    %84 = vector.broadcast %cst_41 : f32 to vector<64x1xf32>
    %85 = arith.divf %83, %84 : vector<64x1xf32>
    %cst_42 = arith.constant 9.99999974E-6 : f32
    %86 = vector.broadcast %cst_42 : f32 to vector<64x1xf32>
    %87 = arith.addf %85, %86 : vector<64x1xf32>
    %88 = math.rsqrt %87 : vector<64x1xf32>
    %89 = vector.broadcast %88 : vector<64x1xf32> to vector<64x128xf32>
    %90 = arith.mulf %80, %89 : vector<64x128xf32>
    %91 = vector.broadcast %73 : vector<1x128xf32> to vector<64x128xf32>
    %92 = arith.mulf %90, %91 : vector<64x128xf32>
    %93 = vector.broadcast %74 : vector<1x128xf32> to vector<64x128xf32>
    %94 = arith.addf %92, %93 : vector<64x128xf32>
    %cst_43 = arith.constant 5.000000e-01 : f32
    %95 = vector.broadcast %cst_43 : f32 to vector<64x128xf32>
    %96 = arith.mulf %95, %94 : vector<64x128xf32>
    %cst_44 = arith.constant 0.707106769 : f32
    %97 = vector.broadcast %cst_44 : f32 to vector<64x128xf32>
    %98 = arith.mulf %94, %97 : vector<64x128xf32>
    %99 = math.absf %98 : vector<64x128xf32>
    %cst_45 = arith.constant 0.327591091 : f32
    %100 = vector.broadcast %cst_45 : f32 to vector<64x128xf32>
    %101 = arith.mulf %100, %99 : vector<64x128xf32>
    %cst_46 = arith.constant 1.000000e+00 : f32
    %102 = vector.broadcast %cst_46 : f32 to vector<64x128xf32>
    %103 = arith.addf %102, %101 : vector<64x128xf32>
    %cst_47 = arith.constant 1.000000e+00 : f32
    %104 = vector.broadcast %cst_47 : f32 to vector<64x128xf32>
    %105 = arith.divf %104, %103 : vector<64x128xf32>
    %cst_48 = arith.constant 1.06140542 : f32
    %106 = vector.broadcast %cst_48 : f32 to vector<64x128xf32>
    %107 = arith.mulf %106, %105 : vector<64x128xf32>
    %cst_49 = arith.constant -1.45315206 : f32
    %108 = vector.broadcast %cst_49 : f32 to vector<64x128xf32>
    %109 = arith.addf %107, %108 : vector<64x128xf32>
    %110 = arith.mulf %109, %105 : vector<64x128xf32>
    %cst_50 = arith.constant 1.42141378 : f32
    %111 = vector.broadcast %cst_50 : f32 to vector<64x128xf32>
    %112 = arith.addf %110, %111 : vector<64x128xf32>
    %113 = arith.mulf %112, %105 : vector<64x128xf32>
    %cst_51 = arith.constant -0.284496725 : f32
    %114 = vector.broadcast %cst_51 : f32 to vector<64x128xf32>
    %115 = arith.addf %113, %114 : vector<64x128xf32>
    %116 = arith.mulf %115, %105 : vector<64x128xf32>
    %cst_52 = arith.constant 0.254829586 : f32
    %117 = vector.broadcast %cst_52 : f32 to vector<64x128xf32>
    %118 = arith.addf %116, %117 : vector<64x128xf32>
    %119 = arith.mulf %118, %105 : vector<64x128xf32>
    %cst_53 = arith.constant 0.000000e+00 : f32
    %120 = vector.broadcast %cst_53 : f32 to vector<64x128xf32>
    %121 = arith.subf %120, %99 : vector<64x128xf32>
    %122 = arith.mulf %121, %99 : vector<64x128xf32>
    %123 = math.exp %122 : vector<64x128xf32>
    %124 = arith.mulf %119, %123 : vector<64x128xf32>
    %cst_54 = arith.constant 1.000000e+00 : f32
    %125 = vector.broadcast %cst_54 : f32 to vector<64x128xf32>
    %126 = arith.subf %125, %124 : vector<64x128xf32>
    %cst_55 = arith.constant 0.000000e+00 : f32
    %127 = vector.broadcast %cst_55 : f32 to vector<64x128xf32>
    %128 = arith.cmpf olt, %98, %127 : vector<64x128xf32>
    %cst_56 = arith.constant 0.000000e+00 : f32
    %129 = vector.broadcast %cst_56 : f32 to vector<64x128xf32>
    %130 = arith.subf %129, %126 : vector<64x128xf32>
    %131 = arith.select %128, %130, %126 : vector<64x128xi1>, vector<64x128xf32>
    %cst_57 = arith.constant 1.000000e+00 : f32
    %132 = vector.broadcast %cst_57 : f32 to vector<64x128xf32>
    %133 = arith.addf %132, %131 : vector<64x128xf32>
    %134 = arith.mulf %96, %133 : vector<64x128xf32>
    %c0_58 = arith.constant 0 : index
    %c0_59 = arith.constant 0 : index
    %135 = vector.load %arg11[%c0_58, %c0_59] : memref<128x48xf32, #tpu.memory_space<vmem>>, vector<128x48xf32>
    %cst_60 = arith.constant dense<0.000000e+00> : vector<64x48xf32>
    %136 = tpu.matmul %134, %135, %cst_60 {dimension_numbers = #tpu.dot_dimension_numbers<[1], [0], [0], [1], [0, 0, 1, 1], [], []>} : vector<64x128xf32>, vector<128x48xf32>, vector<64x48xf32> -> vector<64x48xf32>
    %c0_61 = arith.constant 0 : index
    %c0_62 = arith.constant 0 : index
    %137 = vector.load %arg12[%c0_61, %c0_62] : memref<1x48xf32, #tpu.memory_space<vmem>>, vector<1x48xf32>
    %138 = vector.broadcast %137 : vector<1x48xf32> to vector<64x48xf32>
    %139 = arith.addf %136, %138 : vector<64x48xf32>
    %c0_63 = arith.constant 0 : index
    %c0_64 = arith.constant 0 : index
    %140 = vector.load %arg2[%c0_63, %c0_64] : memref<64x12xf32, #tpu.memory_space<vmem>>, vector<64x12xf32>
    %c0_65 = arith.constant 0 : index
    %c0_66 = arith.constant 0 : index
    %141 = vector.load %arg13[%c0_65, %c0_66] : memref<12x176xf32, #tpu.memory_space<vmem>>, vector<12x176xf32>
    %cst_67 = arith.constant dense<0.000000e+00> : vector<64x176xf32>
    %142 = tpu.matmul %140, %141, %cst_67 {dimension_numbers = #tpu.dot_dimension_numbers<[1], [0], [0], [1], [0, 0, 1, 1], [], []>} : vector<64x12xf32>, vector<12x176xf32>, vector<64x176xf32> -> vector<64x176xf32>
    %143 = vector.extract_strided_slice %142 {offsets = [0, 0], sizes = [64, 48], strides = [1, 1]} : vector<64x176xf32> to vector<64x48xf32>
    %144 = vector.extract_strided_slice %142 {offsets = [0, 128], sizes = [64, 48], strides = [1, 1]} : vector<64x176xf32> to vector<64x48xf32>
    %145 = arith.mulf %139, %143 : vector<64x48xf32>
    %146 = arith.mulf %145, %144 : vector<64x48xf32>
    %c0_68 = arith.constant 0 : index
    %c0_69 = arith.constant 0 : index
    %147 = vector.load %arg14[%c0_68, %c0_69] : memref<48x4xf32, #tpu.memory_space<vmem>>, vector<48x4xf32>
    %cst_70 = arith.constant dense<0.000000e+00> : vector<64x4xf32>
    %148 = tpu.matmul %146, %147, %cst_70 {dimension_numbers = #tpu.dot_dimension_numbers<[1], [0], [0], [1], [0, 0, 1, 1], [], []>} : vector<64x48xf32>, vector<48x4xf32>, vector<64x4xf32> -> vector<64x4xf32>
    %c0_71 = arith.constant 0 : index
    %c0_72 = arith.constant 0 : index
    %149 = vector.load %arg15[%c0_71, %c0_72] : memref<64x4xf32, #tpu.memory_space<vmem>>, vector<64x4xf32>
    tpu.vector_store %arg15[%c0_71, %c0_72], %148 {strides = array<i32>} : memref<64x4xf32, #tpu.memory_space<vmem>>, vector<64x4xf32>,
    return
  }
  func.func @transform_0(%arg0: i32) -> (i32, i32) {
    %c0_i32 = arith.constant 0 : i32
    %c0_i32_0 = arith.constant 0 : i32
    return %arg0, %c0_i32 : i32, i32
  }
  func.func @transform_1(%arg0: i32) -> (i32, i32) {
    %c0_i32 = arith.constant 0 : i32
    %c0_i32_0 = arith.constant 0 : i32
    return %arg0, %c0_i32 : i32, i32
  }
  func.func @transform_2(%arg0: i32) -> (i32, i32) {
    %c0_i32 = arith.constant 0 : i32
    %c0_i32_0 = arith.constant 0 : i32
    %c0_i32_1 = arith.constant 0 : i32
    return %c0_i32, %c0_i32_0 : i32, i32
  }
  func.func @transform_3(%arg0: i32) -> (i32, i32) {
    %c0_i32 = arith.constant 0 : i32
    %c0_i32_0 = arith.constant 0 : i32
    %c0_i32_1 = arith.constant 0 : i32
    return %c0_i32, %c0_i32_0 : i32, i32
  }
  func.func @transform_4(%arg0: i32) -> (i32, i32) {
    %c0_i32 = arith.constant 0 : i32
    %c0_i32_0 = arith.constant 0 : i32
    %c0_i32_1 = arith.constant 0 : i32
    return %c0_i32, %c0_i32_0 : i32, i32
  }
  func.func @transform_5(%arg0: i32) -> (i32, i32) {
    %c0_i32 = arith.constant 0 : i32
    %c0_i32_0 = arith.constant 0 : i32
    %c0_i32_1 = arith.constant 0 : i32
    return %c0_i32, %c0_i32_0 : i32, i32
  }
  func.func @transform_6(%arg0: i32) -> (i32, i32) {
    %c0_i32 = arith.constant 0 : i32
    %c0_i32_0 = arith.constant 0 : i32
    %c0_i32_1 = arith.constant 0 : i32
    return %c0_i32, %c0_i32_0 : i32, i32
  }
  func.func @transform_7(%arg0: i32) -> (i32, i32) {
    %c0_i32 = arith.constant 0 : i32
    %c0_i32_0 = arith.constant 0 : i32
    %c0_i32_1 = arith.constant 0 : i32
    return %c0_i32, %c0_i32_0 : i32, i32
  }
  func.func @transform_8(%arg0: i32) -> (i32, i32) {
    %c0_i32 = arith.constant 0 : i32
    %c0_i32_0 = arith.constant 0 : i32
    %c0_i32_1 = arith.constant 0 : i32
    return %c0_i32, %c0_i32_0 : i32, i32
  }
  func.func @transform_9(%arg0: i32) -> (i32, i32) {
    %c0_i32 = arith.constant 0 : i32
    %c0_i32_0 = arith.constant 0 : i32
    %c0_i32_1 = arith.constant 0 : i32
    return %c0_i32, %c0_i32_0 : i32, i32
  }
  func.func @transform_10(%arg0: i32) -> (i32, i32) {
    %c0_i32 = arith.constant 0 : i32
    %c0_i32_0 = arith.constant 0 : i32
    %c0_i32_1 = arith.constant 0 : i32
    return %c0_i32, %c0_i32_0 : i32, i32
  }
  func.func @transform_11(%arg0: i32) -> (i32, i32) {
    %c0_i32 = arith.constant 0 : i32
    %c0_i32_0 = arith.constant 0 : i32
    %c0_i32_1 = arith.constant 0 : i32
    return %c0_i32, %c0_i32_0 : i32, i32
  }
  func.func @transform_12(%arg0: i32) -> (i32, i32) {
    %c0_i32 = arith.constant 0 : i32
    %c0_i32_0 = arith.constant 0 : i32
    %c0_i32_1 = arith.constant 0 : i32
    return %c0_i32, %c0_i32_0 : i32, i32
  }
  func.func @transform_13(%arg0: i32) -> (i32, i32) {
    %c0_i32 = arith.constant 0 : i32
    %c0_i32_0 = arith.constant 0 : i32
    %c0_i32_1 = arith.constant 0 : i32
    return %c0_i32, %c0_i32_0 : i32, i32
  }
  func.func @transform_14(%arg0: i32) -> (i32, i32) {
    %c0_i32 = arith.constant 0 : i32
    %c0_i32_0 = arith.constant 0 : i32
    return %arg0, %c0_i32 : i32, i32
  }
}

</mosaic_0001>

<llo_original>
// kernel: tpu_custom_call.1
$region0: #{tpu_custom_call.1}
  #allocation0 [shape = 'u32[]', space=smem, size = 0x4, offset = 0x4, fixed_abs, tag = 'smem constant byte address 0x4 - core index']
  #allocation1 [shape = 'u32[144,128]{1,0:T(1,128)}', space=vmem, size = 0x12000, scoped, tag = 'internal scratch']
  %s0 = inlined_call_operand.vmem [shape: f32[128,32], index: 0, kind: input, shape index: {}]
  %s1 = inlined_call_operand.vmem [shape: f32[128,12], index: 1, kind: input, shape index: {}]
  %s2 = inlined_call_operand.vmem [shape: f32[32,128], index: 2, kind: input, shape index: {}]
  %s3 = inlined_call_operand.vmem [shape: f32[1,128], index: 3, kind: input, shape index: {}]
  %s4 = inlined_call_operand.vmem [shape: f32[1,128], index: 4, kind: input, shape index: {}]
  %s5 = inlined_call_operand.vmem [shape: f32[1,128], index: 5, kind: input, shape index: {}]
  %s6 = inlined_call_operand.vmem [shape: f32[128,128], index: 6, kind: input, shape index: {}]
  %s7 = inlined_call_operand.vmem [shape: f32[1,128], index: 7, kind: input, shape index: {}]
  %s8 = inlined_call_operand.vmem [shape: f32[1,128], index: 8, kind: input, shape index: {}]
  %s9 = inlined_call_operand.vmem [shape: f32[1,128], index: 9, kind: input, shape index: {}]
  %s10 = inlined_call_operand.vmem [shape: f32[128,48], index: 10, kind: input, shape index: {}]
  %s11 = inlined_call_operand.vmem [shape: f32[1,48], index: 11, kind: input, shape index: {}]
  %s12 = inlined_call_operand.vmem [shape: f32[12,176], index: 12, kind: input, shape index: {}]
  %s13 = inlined_call_operand.vmem [shape: f32[48,4], index: 13, kind: input, shape index: {}]
  %s14 = inlined_call_operand.vmem [shape: f32[128,4], index: 14, kind: output, shape index: {}]
  %s15 = sld [smem:[#allocation0]]
  $region89: #{tpu_custom_call.1} parent=0
    _
  %s17 = ssub.s32 1, %s15
  %s18 = scalar_select 0, %s17, %s15
  loop: start=0, step=1, limit=4
  $region2: #{tpu_custom_call.1} parent=0 // loop_pre_header
    _
  $region3: #{tpu_custom_call.1} parent=0 // loop_header
    %s20 = sphi 0, %s24
    %p21 = scmp.ge.s32.totalorder %s20, 4
    %s30 = sphi 0, %s32
    %s33 = sphi 0, %s30
    %s34 = sphi 0, %s33
    %s50 = sphi 0, %s34
    %s56 = sphi 0, %s58
    %s59 = sphi 0, %s56
    %s60 = sphi 0, %s59
    %s76 = sphi 0, %s60
    %s80 = sphi 0, %s80
    %s82 = sphi 0, %s80
    %s83 = sphi 0, %s82
    %s97 = sphi 0, %s83
    %s101 = sphi 0, %s101
    %s103 = sphi 0, %s101
    %s104 = sphi 0, %s103
    %s118 = sphi 0, %s104
    %s122 = sphi 0, %s122
    %s124 = sphi 0, %s122
    %s125 = sphi 0, %s124
    %s139 = sphi 0, %s125
    %s143 = sphi 0, %s143
    %s145 = sphi 0, %s143
    %s146 = sphi 0, %s145
    %s160 = sphi 0, %s146
    %s164 = sphi 0, %s164
    %s166 = sphi 0, %s164
    %s167 = sphi 0, %s166
    %s181 = sphi 0, %s167
    %s185 = sphi 0, %s185
    %s187 = sphi 0, %s185
    %s188 = sphi 0, %s187
    %s202 = sphi 0, %s188
    %s206 = sphi 0, %s206
    %s208 = sphi 0, %s206
    %s209 = sphi 0, %s208
    %s223 = sphi 0, %s209
    %s227 = sphi 0, %s227
    %s229 = sphi 0, %s227
    %s230 = sphi 0, %s229
    %s244 = sphi 0, %s230
    %s248 = sphi 0, %s248
    %s250 = sphi 0, %s248
    %s251 = sphi 0, %s250
    %s265 = sphi 0, %s251
    %s269 = sphi 0, %s269
    %s271 = sphi 0, %s269
    %s272 = sphi 0, %s271
    %s286 = sphi 0, %s272
    %s290 = sphi 0, %s290
    %s292 = sphi 0, %s290
    %s293 = sphi 0, %s292
    %s307 = sphi 0, %s293
    %s311 = sphi 0, %s311
    %s313 = sphi 0, %s311
    %s314 = sphi 0, %s313
    %s328 = sphi 0, %s314
    %s334 = sphi 0, %s336
    %s337 = sphi 0, %s334
    %s338 = sphi 0, %s337
    %s354 = sphi 0, %s338
  $region4: #{tpu_custom_call.1} parent=0 // loop_header_branch
    %23 = sbr.rel (%p21) target = $region8
  $region5: #{tpu_custom_call.1} parent=0 // loop_body
    %s25 = ssub.s32 %s20, 1
    %s26 = ssub.s32 %s20, 2
    %s27 = sadd.s32 %s20, 1
    %s28 = ssub.s32 %s20, %s27
    %p29 = scmp.eq.s32.totalorder %s28, 0
    %s31 = sadd.s32 %s30, 1
    %s32 = scalar_select %p29, %s30, %s31
    %p35 = pneg %p29
    %p36 = scmp.eq.s32.totalorder %s20, 1
    %p37 = por %p35, %p36
    %p38 = scmp.ne.s32.totalorder %s30, %s33
    %p39 = scmp.eq.s32.totalorder %s20, 0
    %p40 = por %p38, %p39
    %p41 = scmp.ne.s32.totalorder %s30, %s33
    %p42 = scmp.eq.s32.totalorder %s25, 1
    %p43 = por %p41, %p42
    %p44 = scmp.ne.s32.totalorder %s33, %s34
    %p45 = scmp.eq.s32.totalorder %s25, 0
    %p46 = por %p44, %p45
    %p47 = scmp.ne.s32.totalorder %s33, %s34
    %p48 = scmp.eq.s32.totalorder %s26, 1
    %p49 = por %p47, %p48
    %p51 = scmp.ne.s32.totalorder %s34, %s50
    %p52 = scmp.eq.s32.totalorder %s26, 0
    %p53 = por %p51, %p52
    %s54 = ssub.s32 %s20, %s27
    %p55 = scmp.eq.s32.totalorder %s54, 0
    %s57 = sadd.s32 %s56, 1
    %s58 = scalar_select %p55, %s56, %s57
    %p61 = pneg %p55
    %p62 = scmp.eq.s32.totalorder %s20, 1
    %p63 = por %p61, %p62
    %p64 = scmp.ne.s32.totalorder %s56, %s59
    %p65 = scmp.eq.s32.totalorder %s20, 0
    %p66 = por %p64, %p65
    %p67 = scmp.ne.s32.totalorder %s56, %s59
    %p68 = scmp.eq.s32.totalorder %s25, 1
    %p69 = por %p67, %p68
    %p70 = scmp.ne.s32.totalorder %s59, %s60
    %p71 = scmp.eq.s32.totalorder %s25, 0
    %p72 = por %p70, %p71
    %p73 = scmp.ne.s32.totalorder %s59, %s60
    %p74 = scmp.eq.s32.totalorder %s26, 1
    %p75 = por %p73, %p74
    %p77 = scmp.ne.s32.totalorder %s60, %s76
    %p78 = scmp.eq.s32.totalorder %s26, 0
    %p79 = por %p77, %p78
    %s81 = sadd.s32 %s80, 1
    %p84 = scmp.eq.s32.totalorder %s20, 1
    %p85 = scmp.ne.s32.totalorder %s80, %s82
    %p86 = scmp.eq.s32.totalorder %s20, 0
    %p87 = por %p85, %p86
    %p88 = scmp.ne.s32.totalorder %s80, %s82
    %p89 = scmp.eq.s32.totalorder %s25, 1
    %p90 = por %p88, %p89
    %p91 = scmp.ne.s32.totalorder %s82, %s83
    %p92 = scmp.eq.s32.totalorder %s25, 0
    %p93 = por %p91, %p92
    %p94 = scmp.ne.s32.totalorder %s82, %s83
    %p95 = scmp.eq.s32.totalorder %s26, 1
    %p96 = por %p94, %p95
    %p98 = scmp.ne.s32.totalorder %s83, %s97
    %p99 = scmp.eq.s32.totalorder %s26, 0
    %p100 = por %p98, %p99
    %s102 = sadd.s32 %s101, 1
    %p105 = scmp.eq.s32.totalorder %s20, 1
    %p106 = scmp.ne.s32.totalorder %s101, %s103
    %p107 = scmp.eq.s32.totalorder %s20, 0
    %p108 = por %p106, %p107
    %p109 = scmp.ne.s32.totalorder %s101, %s103
    %p110 = scmp.eq.s32.totalorder %s25, 1
    %p111 = por %p109, %p110
    %p112 = scmp.ne.s32.totalorder %s103, %s104
    %p113 = scmp.eq.s32.totalorder %s25, 0
    %p114 = por %p112, %p113
    %p115 = scmp.ne.s32.totalorder %s103, %s104
    %p116 = scmp.eq.s32.totalorder %s26, 1
    %p117 = por %p115, %p116
    %p119 = scmp.ne.s32.totalorder %s104, %s118
    %p120 = scmp.eq.s32.totalorder %s26, 0
    %p121 = por %p119, %p120
    %s123 = sadd.s32 %s122, 1
    %p126 = scmp.eq.s32.totalorder %s20, 1
    %p127 = scmp.ne.s32.totalorder %s122, %s124
    %p128 = scmp.eq.s32.totalorder %s20, 0
    %p129 = por %p127, %p128
    %p130 = scmp.ne.s32.totalorder %s122, %s124
    %p131 = scmp.eq.s32.totalorder %s25, 1
    %p132 = por %p130, %p131
    %p133 = scmp.ne.s32.totalorder %s124, %s125
    %p134 = scmp.eq.s32.totalorder %s25, 0
    %p135 = por %p133, %p134
    %p136 = scmp.ne.s32.totalorder %s124, %s125
    %p137 = scmp.eq.s32.totalorder %s26, 1
    %p138 = por %p136, %p137
    %p140 = scmp.ne.s32.totalorder %s125, %s139
    %p141 = scmp.eq.s32.totalorder %s26, 0
    %p142 = por %p140, %p141
    %s144 = sadd.s32 %s143, 1
    %p147 = scmp.eq.s32.totalorder %s20, 1
    %p148 = scmp.ne.s32.totalorder %s143, %s145
    %p149 = scmp.eq.s32.totalorder %s20, 0
    %p150 = por %p148, %p149
    %p151 = scmp.ne.s32.totalorder %s143, %s145
    %p152 = scmp.eq.s32.totalorder %s25, 1
    %p153 = por %p151, %p152
    %p154 = scmp.ne.s32.totalorder %s145, %s146
    %p155 = scmp.eq.s32.totalorder %s25, 0
    %p156 = por %p154, %p155
    %p157 = scmp.ne.s32.totalorder %s145, %s146
    %p158 = scmp.eq.s32.totalorder %s26, 1
    %p159 = por %p157, %p158
    %p161 = scmp.ne.s32.totalorder %s146, %s160
    %p162 = scmp.eq.s32.totalorder %s26, 0
    %p163 = por %p161, %p162
    %s165 = sadd.s32 %s164, 1
    %p168 = scmp.eq.s32.totalorder %s20, 1
    %p169 = scmp.ne.s32.totalorder %s164, %s166
    %p170 = scmp.eq.s32.totalorder %s20, 0
    %p171 = por %p169, %p170
    %p172 = scmp.ne.s32.totalorder %s164, %s166
    %p173 = scmp.eq.s32.totalorder %s25, 1
    %p174 = por %p172, %p173
    %p175 = scmp.ne.s32.totalorder %s166, %s167
    %p176 = scmp.eq.s32.totalorder %s25, 0
    %p177 = por %p175, %p176
    %p178 = scmp.ne.s32.totalorder %s166, %s167
    %p179 = scmp.eq.s32.totalorder %s26, 1
    %p180 = por %p178, %p179
    %p182 = scmp.ne.s32.totalorder %s167, %s181
    %p183 = scmp.eq.s32.totalorder %s26, 0
    %p184 = por %p182, %p183
    %s186 = sadd.s32 %s185, 1
    %p189 = scmp.eq.s32.totalorder %s20, 1
    %p190 = scmp.ne.s32.totalorder %s185, %s187
    %p191 = scmp.eq.s32.totalorder %s20, 0
    %p192 = por %p190, %p191
    %p193 = scmp.ne.s32.totalorder %s185, %s187
    %p194 = scmp.eq.s32.totalorder %s25, 1
    %p195 = por %p193, %p194
    %p196 = scmp.ne.s32.totalorder %s187, %s188
    %p197 = scmp.eq.s32.totalorder %s25, 0
    %p198 = por %p196, %p197
    %p199 = scmp.ne.s32.totalorder %s187, %s188
    %p200 = scmp.eq.s32.totalorder %s26, 1
    %p201 = por %p199, %p200
    %p203 = scmp.ne.s32.totalorder %s188, %s202
    %p204 = scmp.eq.s32.totalorder %s26, 0
    %p205 = por %p203, %p204
    %s207 = sadd.s32 %s206, 1
    %p210 = scmp.eq.s32.totalorder %s20, 1
    %p211 = scmp.ne.s32.totalorder %s206, %s208
    %p212 = scmp.eq.s32.totalorder %s20, 0
    %p213 = por %p211, %p212
    %p214 = scmp.ne.s32.totalorder %s206, %s208
    %p215 = scmp.eq.s32.totalorder %s25, 1
    %p216 = por %p214, %p215
    %p217 = scmp.ne.s32.totalorder %s208, %s209
    %p218 = scmp.eq.s32.totalorder %s25, 0
    %p219 = por %p217, %p218
    %p220 = scmp.ne.s32.totalorder %s208, %s209
    %p221 = scmp.eq.s32.totalorder %s26, 1
    %p222 = por %p220, %p221
    %p224 = scmp.ne.s32.totalorder %s209, %s223
    %p225 = scmp.eq.s32.totalorder %s26, 0
    %p226 = por %p224, %p225
    %s228 = sadd.s32 %s227, 1
    %p231 = scmp.eq.s32.totalorder %s20, 1
    %p232 = scmp.ne.s32.totalorder %s227, %s229
    %p233 = scmp.eq.s32.totalorder %s20, 0
    %p234 = por %p232, %p233
    %p235 = scmp.ne.s32.totalorder %s227, %s229
    %p236 = scmp.eq.s32.totalorder %s25, 1
    %p237 = por %p235, %p236
    %p238 = scmp.ne.s32.totalorder %s229, %s230
    %p239 = scmp.eq.s32.totalorder %s25, 0
    %p240 = por %p238, %p239
    %p241 = scmp.ne.s32.totalorder %s229, %s230
    %p242 = scmp.eq.s32.totalorder %s26, 1
    %p243 = por %p241, %p242
    %p245 = scmp.ne.s32.totalorder %s230, %s244
    %p246 = scmp.eq.s32.totalorder %s26, 0
    %p247 = por %p245, %p246
    %s249 = sadd.s32 %s248, 1
    %p252 = scmp.eq.s32.totalorder %s20, 1
    %p253 = scmp.ne.s32.totalorder %s248, %s250
    %p254 = scmp.eq.s32.totalorder %s20, 0
    %p255 = por %p253, %p254
    %p256 = scmp.ne.s32.totalorder %s248, %s250
    %p257 = scmp.eq.s32.totalorder %s25, 1
    %p258 = por %p256, %p257
    %p259 = scmp.ne.s32.totalorder %s250, %s251
    %p260 = scmp.eq.s32.totalorder %s25, 0
    %p261 = por %p259, %p260
    %p262 = scmp.ne.s32.totalorder %s250, %s251
    %p263 = scmp.eq.s32.totalorder %s26, 1
    %p264 = por %p262, %p263
    %p266 = scmp.ne.s32.totalorder %s251, %s265
    %p267 = scmp.eq.s32.totalorder %s26, 0
    %p268 = por %p266, %p267
    %s270 = sadd.s32 %s269, 1
    %p273 = scmp.eq.s32.totalorder %s20, 1
    %p274 = scmp.ne.s32.totalorder %s269, %s271
    %p275 = scmp.eq.s32.totalorder %s20, 0
    %p276 = por %p274, %p275
    %p277 = scmp.ne.s32.totalorder %s269, %s271
    %p278 = scmp.eq.s32.totalorder %s25, 1
    %p279 = por %p277, %p278
    %p280 = scmp.ne.s32.totalorder %s271, %s272
    %p281 = scmp.eq.s32.totalorder %s25, 0
    %p282 = por %p280, %p281
    %p283 = scmp.ne.s32.totalorder %s271, %s272
    %p284 = scmp.eq.s32.totalorder %s26, 1
    %p285 = por %p283, %p284
    %p287 = scmp.ne.s32.totalorder %s272, %s286
    %p288 = scmp.eq.s32.totalorder %s26, 0
    %p289 = por %p287, %p288
    %s291 = sadd.s32 %s290, 1
    %p294 = scmp.eq.s32.totalorder %s20, 1
    %p295 = scmp.ne.s32.totalorder %s290, %s292
    %p296 = scmp.eq.s32.totalorder %s20, 0
    %p297 = por %p295, %p296
    %p298 = scmp.ne.s32.totalorder %s290, %s292
    %p299 = scmp.eq.s32.totalorder %s25, 1
    %p300 = por %p298, %p299
    %p301 = scmp.ne.s32.totalorder %s292, %s293
    %p302 = scmp.eq.s32.totalorder %s25, 0
    %p303 = por %p301, %p302
    %p304 = scmp.ne.s32.totalorder %s292, %s293
    %p305 = scmp.eq.s32.totalorder %s26, 1
    %p306 = por %p304, %p305
    %p308 = scmp.ne.s32.totalorder %s293, %s307
    %p309 = scmp.eq.s32.totalorder %s26, 0
    %p310 = por %p308, %p309
    %s312 = sadd.s32 %s311, 1
    %p315 = scmp.eq.s32.totalorder %s20, 1
    %p316 = scmp.ne.s32.totalorder %s311, %s313
    %p317 = scmp.eq.s32.totalorder %s20, 0
    %p318 = por %p316, %p317
    %p319 = scmp.ne.s32.totalorder %s311, %s313
    %p320 = scmp.eq.s32.totalorder %s25, 1
    %p321 = por %p319, %p320
    %p322 = scmp.ne.s32.totalorder %s313, %s314
    %p323 = scmp.eq.s32.totalorder %s25, 0
    %p324 = por %p322, %p323
    %p325 = scmp.ne.s32.totalorder %s313, %s314
    %p326 = scmp.eq.s32.totalorder %s26, 1
    %p327 = por %p325, %p326
    %p329 = scmp.ne.s32.totalorder %s314, %s328
    %p330 = scmp.eq.s32.totalorder %s26, 0
    %p331 = por %p329, %p330
    %s332 = ssub.s32 %s20, %s27
    %p333 = scmp.eq.s32.totalorder %s332, 0
    %s335 = sadd.s32 %s334, 1
    %s336 = scalar_select %p333, %s334, %s335
    %p339 = pneg %p333
    %p340 = scmp.eq.s32.totalorder %s20, 1
    %p341 = por %p339, %p340
    %p342 = scmp.ne.s32.totalorder %s334, %s337
    %p343 = scmp.eq.s32.totalorder %s20, 0
    %p344 = por %p342, %p343
    %p345 = scmp.ne.s32.totalorder %s334, %s337
    %p346 = scmp.eq.s32.totalorder %s25, 1
    %p347 = por %p345, %p346
    %p348 = scmp.ne.s32.totalorder %s337, %s338
    %p349 = scmp.eq.s32.totalorder %s25, 0
    %p350 = por %p348, %p349
    %p351 = scmp.ne.s32.totalorder %s337, %s338
    %p352 = scmp.eq.s32.totalorder %s26, 1
    %p353 = por %p351, %p352
    %p355 = scmp.ne.s32.totalorder %s338, %s354
    %p356 = scmp.eq.s32.totalorder %s26, 0
    %p357 = por %p355, %p356
    %p358 = scmp.le.s32.totalorder 1, %s20
    %p359 = scmp.lt.s32.totalorder %s20, 3
    %p360 = pnand %p358, %p359
    %p361 = pneg %p360
    // Predicated region
    $region9: #{tpu_custom_call.1} parent=5 // pred_check
      _
    $region10: #{tpu_custom_call.1} parent=5 // pred_check_branch
      %363 = sbr.rel (%p360) target = $region12
    $region11: #{tpu_custom_call.1} parent=5 // pred_region
      %s364 = ssub.s32 %s20, 1
      // Predicated region
      $region13: #{tpu_custom_call.1} parent=11 // pred_check
        %p365 = pneg %p93
      $region14: #{tpu_custom_call.1} parent=11 // pred_check_branch
        %367 = sbr.rel (%p365) target = $region16
      $region15: #{tpu_custom_call.1} parent=11 // pred_region
        _
      $region16: #{tpu_custom_call.1} parent=11 // pred_fallthru
        _
      // Predicated region
      $region17: #{tpu_custom_call.1} parent=11 // pred_check
        %p368 = pneg %p114
      $region18: #{tpu_custom_call.1} parent=11 // pred_check_branch
        %370 = sbr.rel (%p368) target = $region20
      $region19: #{tpu_custom_call.1} parent=11 // pred_region
        _
      $region20: #{tpu_custom_call.1} parent=11 // pred_fallthru
        _
      // Predicated region
      $region21: #{tpu_custom_call.1} parent=11 // pred_check
        %p371 = pneg %p135
      $region22: #{tpu_custom_call.1} parent=11 // pred_check_branch
        %373 = sbr.rel (%p371) target = $region24
      $region23: #{tpu_custom_call.1} parent=11 // pred_region
        _
      $region24: #{tpu_custom_call.1} parent=11 // pred_fallthru
        _
      // Predicated region
      $region25: #{tpu_custom_call.1} parent=11 // pred_check
        %p374 = pneg %p156
      $region26: #{tpu_custom_call.1} parent=11 // pred_check_branch
        %376 = sbr.rel (%p374) target = $region28
      $region27: #{tpu_custom_call.1} parent=11 // pred_region
        _
      $region28: #{tpu_custom_call.1} parent=11 // pred_fallthru
        _
      // Predicated region
      $region29: #{tpu_custom_call.1} parent=11 // pred_check
        %p377 = pneg %p177
      $region30: #{tpu_custom_call.1} parent=11 // pred_check_branch
        %379 = sbr.rel (%p377) target = $region32
      $region31: #{tpu_custom_call.1} parent=11 // pred_region
        _
      $region32: #{tpu_custom_call.1} parent=11 // pred_fallthru
        _
      // Predicated region
      $region33: #{tpu_custom_call.1} parent=11 // pred_check
        %p380 = pneg %p198
      $region34: #{tpu_custom_call.1} parent=11 // pred_check_branch
        %382 = sbr.rel (%p380) target = $region36
      $region35: #{tpu_custom_call.1} parent=11 // pred_region
        _
      $region36: #{tpu_custom_call.1} parent=11 // pred_fallthru
        _
      // Predicated region
      $region37: #{tpu_custom_call.1} parent=11 // pred_check
        %p383 = pneg %p219
      $region38: #{tpu_custom_call.1} parent=11 // pred_check_branch
        %385 = sbr.rel (%p383) target = $region40
      $region39: #{tpu_custom_call.1} parent=11 // pred_region
        _
      $region40: #{tpu_custom_call.1} parent=11 // pred_fallthru
        _
      // Predicated region
      $region41: #{tpu_custom_call.1} parent=11 // pred_check
        %p386 = pneg %p240
      $region42: #{tpu_custom_call.1} parent=11 // pred_check_branch
        %388 = sbr.rel (%p386) target = $region44
      $region43: #{tpu_custom_call.1} parent=11 // pred_region
        _
      $region44: #{tpu_custom_call.1} parent=11 // pred_fallthru
        _
      // Predicated region
      $region45: #{tpu_custom_call.1} parent=11 // pred_check
        %p389 = pneg %p261
      $region46: #{tpu_custom_call.1} parent=11 // pred_check_branch
        %391 = sbr.rel (%p389) target = $region48
      $region47: #{tpu_custom_call.1} parent=11 // pred_region
        _
      $region48: #{tpu_custom_call.1} parent=11 // pred_fallthru
        _
      // Predicated region
      $region49: #{tpu_custom_call.1} parent=11 // pred_check
        %p392 = pneg %p282
      $region50: #{tpu_custom_call.1} parent=11 // pred_check_branch
        %394 = sbr.rel (%p392) target = $region52
      $region51: #{tpu_custom_call.1} parent=11 // pred_region
        _
      $region52: #{tpu_custom_call.1} parent=11 // pred_fallthru
        _
      // Predicated region
      $region53: #{tpu_custom_call.1} parent=11 // pred_check
        %p395 = pneg %p303
      $region54: #{tpu_custom_call.1} parent=11 // pred_check_branch
        %397 = sbr.rel (%p395) target = $region56
      $region55: #{tpu_custom_call.1} parent=11 // pred_region
        _
      $region56: #{tpu_custom_call.1} parent=11 // pred_fallthru
        _
      // Predicated region
      $region57: #{tpu_custom_call.1} parent=11 // pred_check
        %p398 = pneg %p324
      $region58: #{tpu_custom_call.1} parent=11 // pred_check_branch
        %400 = sbr.rel (%p398) target = $region60
      $region59: #{tpu_custom_call.1} parent=11 // pred_region
        _
      $region60: #{tpu_custom_call.1} parent=11 // pred_fallthru
        _
    $region12: #{tpu_custom_call.1} parent=5 // pred_fallthru
      _
    %p401 = scmp.lt.s32.totalorder %s20, 2
    // Predicated region
    $region61: #{tpu_custom_call.1} parent=5 // pred_check
      %p402 = pneg %p401
    $region62: #{tpu_custom_call.1} parent=5 // pred_check_branch
      %404 = sbr.rel (%p402) target = $region64
    $region63: #{tpu_custom_call.1} parent=5 // pred_region
      // Predicated region
      $region65: #{tpu_custom_call.1} parent=63 // pred_check
        %p405 = pneg %p40
      $region66: #{tpu_custom_call.1} parent=63 // pred_check_branch
        %407 = sbr.rel (%p405) target = $region68
      $region67: #{tpu_custom_call.1} parent=63 // pred_region
        %s408 = smul.u32 8, %s20
        %p409 = scmp.lt.s32.totalorder %s408, 15
        %s410 = scalar_select %p409, %s408, 15
        %s411 = smul.addr %s410, 8
        %s412 = scalar_lea.vmem %s0, %s411
        %s413 = smul.u32 8, %s20
      $region68: #{tpu_custom_call.1} parent=63 // pred_fallthru
        _
      // Predicated region
      $region69: #{tpu_custom_call.1} parent=63 // pred_check
        %p414 = pneg %p66
      $region70: #{tpu_custom_call.1} parent=63 // pred_check_branch
        %416 = sbr.rel (%p414) target = $region72
      $region71: #{tpu_custom_call.1} parent=63 // pred_region
        %s417 = smul.u32 8, %s20
        %p418 = scmp.lt.s32.totalorder %s417, 15
        %s419 = scalar_select %p418, %s417, 15
        %s420 = smul.addr %s419, 8
        %s421 = scalar_lea.vmem %s1, %s420
        %s422 = smul.u32 8, %s20
      $region72: #{tpu_custom_call.1} parent=63 // pred_fallthru
        _
    $region64: #{tpu_custom_call.1} parent=5 // pred_fallthru
      _
    %p423 = scmp.le.s32.totalorder 1, %s20
    %p424 = scmp.lt.s32.totalorder %s20, 3
    %p425 = pnand %p423, %p424
    %p426 = pneg %p425
    // Predicated region
    $region73: #{tpu_custom_call.1} parent=5 // pred_check
      _
    $region74: #{tpu_custom_call.1} parent=5 // pred_check_branch
      %428 = sbr.rel (%p425) target = $region76
    $region75: #{tpu_custom_call.1} parent=5 // pred_region
      %s429 = ssub.s32 %s20, 1
      %s430 = smul.u32 8, %s25
      %p431 = scmp.lt.s32.totalorder %s430, 15
      %s432 = scalar_select %p431, %s430, 15
      %s433 = smul.addr %s432, 8
      %s434 = scalar_lea.vmem %s0, %s433
      %p435 = pneg %p46
      %p436 = pneg %p43
      %s437 = smul.u32 8, %s25
      %p438 = scmp.lt.s32.totalorder %s437, 15
      %s439 = scalar_select %p438, %s437, 15
      %s440 = smul.addr %s439, 8
      %s441 = scalar_lea.vmem %s1, %s440
      %p442 = pneg %p72
      %p443 = pneg %p69
      %p444 = pneg %p93
      %p445 = pneg %p90
      %p446 = pneg %p114
      %p447 = pneg %p111
      %p448 = pneg %p135
      %p449 = pneg %p132
      %p450 = pneg %p156
      %p451 = pneg %p153
      %p452 = pneg %p177
      %p453 = pneg %p174
      %p454 = pneg %p198
      %p455 = pneg %p195
      %p456 = pneg %p219
      %p457 = pneg %p216
      %p458 = pneg %p240
      %p459 = pneg %p237
      %p460 = pneg %p261
      %p461 = pneg %p258
      %p462 = pneg %p282
      %p463 = pneg %p279
      %p464 = pneg %p303
      %p465 = pneg %p300
      %p466 = pneg %p324
      %p467 = pneg %p321
      %p468 = pneg %p350
      %p469 = pneg %p347
      %s470 = smul.u32 8, %s25
      %p471 = scmp.lt.s32.totalorder %s470, 15
      %s472 = scalar_select %p471, %s470, 15
      %s473 = smul.addr %s472, 8
      %s474 = scalar_lea.vmem %s14, %s473
      %s475 = smul.u32 8, %s25
      %p476 = scmp.lt.s32.totalorder %s475, 15
      %s477 = scalar_select %p476, %s475, 15
      %s478 = smul.addr %s477, 8
      %s479 = scalar_lea.vmem %s0, %s478
      %s480 = smul.u32 8, %s25
      %s481 = smul.u32 8, %s25
      %p482 = scmp.lt.s32.totalorder %s481, 15
      %s483 = scalar_select %p482, %s481, 15
      %s484 = smul.addr %s483, 8
      %s485 = scalar_lea.vmem %s1, %s484
      %s486 = smul.u32 8, %s25
      %s487 = smul.u32 8, %s25
      %p488 = scmp.lt.s32.totalorder %s487, 15
      %s489 = scalar_select %p488, %s487, 15
      %s490 = smul.addr %s489, 8
      %s491 = scalar_lea.vmem %s14, %s490
      %s492 = smul.u32 8, %s25
      %v493 = vld [vmem:[%s479] sm:$0xff]
      %v494 = vld [vmem:[%s479 + $0x8] sm:$0xff]
      %v495 = vld [vmem:[%s479 + $0x10] sm:$0xff]
      %v496 = vld [vmem:[%s479 + $0x18] sm:$0xff]
      %v497 = vld [vmem:[%s479 + $0x20] sm:$0xff]
      %v498 = vld [vmem:[%s479 + $0x28] sm:$0xff]
      %v499 = vld [vmem:[%s479 + $0x30] sm:$0xff]
      %v500 = vld [vmem:[%s479 + $0x38] sm:$0xff]
      %v501 = vld [vmem:[%s2] sm:$0xff]
      %v502 = vld [vmem:[%s2 + $0x8] sm:$0xff]
      %v503 = vld [vmem:[%s2 + $0x10] sm:$0xff]
      %v504 = vld [vmem:[%s2 + $0x18] sm:$0xff]
      %v505 = vld [vmem:[%s3] sm:$0x1]
      %v507 = vlaneseq
      %v508 = vshrl.u32 %v507, 7
      %v509 = vsub.s32 0, %v508
      %v510 = vrot.slane %v505, %v509
      %vm512 = vcmask 261120
      %v514 = vsel %vm512, %v493, 0
      %v517 = vsel %vm512, %v494, 0
      %v520 = vsel %vm512, %v495, 0
      %v523 = vsel %vm512, %v496, 0
      %v526 = vsel %vm512, %v497, 0
      %v529 = vsel %vm512, %v498, 0
      %v532 = vsel %vm512, %v499, 0
      %v535 = vsel %vm512, %v500, 0
      %537 = vmatprep.subr.mxu0 0.0
      %538 = vmatpush1.msra.mxu0 %v501
      %539 = vmatprep.subr.mxu0 0.0
      %540 = vmatpush1.msra.mxu0 %v502
      %541 = vmatprep.subr.mxu0 0.0
      %542 = vmatpush1.msra.mxu0 %v503
      %543 = vmatprep.subr.mxu0 0.0
      %544 = vmatpush1.msra.mxu0 %v504
      %545 = vmatprep.subr.mxu0 0.0
      %546 = vmatpush1.msra.mxu0 0.0
      %547 = vmatprep.subr.mxu0 0.0
      %548 = vmatpush1.msra.mxu0 0.0
      %549 = vmatprep.subr.mxu0 0.0
      %550 = vmatpush1.msra.mxu0 0.0
      %551 = vmatprep.subr.mxu0 0.0
      %552 = vmatpush1.msra.mxu0 0.0
      %553 = vmatprep.subr.mxu0 0.0
      %554 = vmatpush1.msra.mxu0 0.0
      %555 = vmatprep.subr.mxu0 0.0
      %556 = vmatpush1.msra.mxu0 0.0
      %557 = vmatprep.subr.mxu0 0.0
      %558 = vmatpush1.msra.mxu0 0.0
      %559 = vmatprep.subr.mxu0 0.0
      %560 = vmatpush1.msra.mxu0 0.0
      %561 = vmatprep.subr.mxu0 0.0
      %562 = vmatpush1.msra.mxu0 0.0
      %563 = vmatprep.subr.mxu0 0.0
      %564 = vmatpush1.msra.mxu0 0.0
      %565 = vmatprep.subr.mxu0 0.0
      %566 = vmatpush1.msra.mxu0 0.0
      %567 = vmatprep.subr.mxu0 0.0
      %568 = vmatpush1.msra.mxu0 0.0
      %569 = vmatprep.subr.mxu0 0.0
      %570 = vmatpush1.msra.mxu0 0.0
      %571 = vmatprep.subr.mxu0 0.0
      %572 = vmatpush1.msra.mxu0 0.0
      %573 = vmatprep.subr.mxu0 0.0
      %574 = vmatpush1.msra.mxu0 0.0
      %575 = vmatprep.subr.mxu0 0.0
      %576 = vmatpush1.msra.mxu0 0.0
      %577 = vmatprep.subr.mxu0 0.0
      %578 = vmatpush1.msra.mxu0 0.0
      %579 = vmatprep.subr.mxu0 0.0
      %580 = vmatpush1.msra.mxu0 0.0
      %581 = vmatprep.subr.mxu0 0.0
      %582 = vmatpush1.msra.mxu0 0.0
      %583 = vmatprep.subr.mxu0 0.0
      %584 = vmatpush1.msra.mxu0 0.0
      %585 = vmatprep.subr.mxu0 0.0
      %586 = vmatpush1.msra.mxu0 0.0
      %587 = vmatprep.subr.mxu0 0.0
      %588 = vmatpush1.msra.mxu0 0.0
      %589 = vmatprep.subr.mxu0 0.0
      %590 = vmatpush1.msra.mxu0 0.0
      %591 = vmatprep.subr.mxu0 0.0
      %592 = vmatpush1.msra.mxu0 0.0
      %593 = vmatprep.subr.mxu0 0.0
      %594 = vmatpush1.msra.mxu0 0.0
      %595 = vmatprep.subr.mxu0 0.0
      %596 = vmatpush1.msra.mxu0 0.0
      %597 = vmatprep.subr.mxu0 0.0
      %598 = vmatpush1.msra.mxu0 0.0
      %599 = vmatprep.subr.mxu0 0.0
      %600 = vmatpush1.msra.mxu0 0.0
      %601 = vmatprep.mubr.f32.mxu0 0.0
      %602 = vmatmul.mubr.f32.gmra.mrb[0].mxu0 %v514
      %v603 = vpop.f32.mrb[0].mxu0
      %v604 = vadd.f32 %v510, %v603
      %v605 = vpop.f32.mrb[0].mxu0
      %606 = vmatprep.mubr.f32.mxu0 0.0
      %607 = vmatmul.mubr.f32.gmra.mrb[0].mxu0 %v517
      %v608 = vpop.f32.mrb[0].mxu0
      %v609 = vadd.f32 %v510, %v608
      %v610 = vpop.f32.mrb[0].mxu0
      %611 = vmatprep.mubr.f32.mxu0 0.0
      %612 = vmatmul.mubr.f32.gmra.mrb[0].mxu0 %v520
      %v613 = vpop.f32.mrb[0].mxu0
      %v614 = vadd.f32 %v510, %v613
      %v615 = vpop.f32.mrb[0].mxu0
      %616 = vmatprep.mubr.f32.mxu0 0.0
      %617 = vmatmul.mubr.f32.gmra.mrb[0].mxu0 %v523
      %v618 = vpop.f32.mrb[0].mxu0
      %v619 = vadd.f32 %v510, %v618
      %v620 = vpop.f32.mrb[0].mxu0
      %621 = vmatprep.mubr.f32.mxu0 0.0
      %622 = vmatmul.mubr.f32.gmra.mrb[0].mxu0 %v526
      %v623 = vpop.f32.mrb[0].mxu0
      %v624 = vadd.f32 %v510, %v623
      %v625 = vpop.f32.mrb[0].mxu0
      %626 = vmatprep.mubr.f32.mxu0 0.0
      %627 = vmatmul.mubr.f32.gmra.mrb[0].mxu0 %v529
      %v628 = vpop.f32.mrb[0].mxu0
      %v629 = vadd.f32 %v510, %v628
      %v630 = vpop.f32.mrb[0].mxu0
      %631 = vmatprep.mubr.f32.mxu0 0.0
      %632 = vmatmul.mubr.f32.gmra.mrb[0].mxu0 %v532
      %v633 = vpop.f32.mrb[0].mxu0
      %v634 = vadd.f32 %v510, %v633
      %v635 = vpop.f32.mrb[0].mxu0
      %636 = vmatprep.mubr.f32.mxu0 0.0
      %637 = vmatmul.mubr.f32.gmra.mrb[0].mxu0 %v535
      %v638 = vpop.f32.mrb[0].mxu0
      %v639 = vadd.f32 %v510, %v638
      %v640 = vpop.f32.mrb[0].mxu0
      %641 = vdwg.mxu0
      %v642 = vld [vmem:[%s4] sm:$0x1]
      %v643 = vld [vmem:[%s5] sm:$0x1]
      %644 = vadd.xlane.f32.xlu0 %v604
      %v645 = vpop.xlane.xlu0 %644
      %646 = vadd.xlane.f32.xlu0 %v609
      %v647 = vpop.xlane.xlu0 %646
      %648 = vadd.xlane.f32.xlu0 %v614
      %v649 = vpop.xlane.xlu0 %648
      %650 = vadd.xlane.f32.xlu0 %v619
      %v651 = vpop.xlane.xlu0 %650
      %652 = vadd.xlane.f32.xlu0 %v624
      %v653 = vpop.xlane.xlu0 %652
      %654 = vadd.xlane.f32.xlu0 %v629
      %v655 = vpop.xlane.xlu0 %654
      %656 = vadd.xlane.f32.xlu0 %v634
      %v657 = vpop.xlane.xlu0 %656
      %658 = vadd.xlane.f32.xlu0 %v639
      %v659 = vpop.xlane.xlu0 %658
      %v660 = vrcp.pop 128.0
      %v661 = vmul.f32 %v645, %v660
      %v662 = vmul.f32 %v647, %v660
      %v663 = vmul.f32 %v649, %v660
      %v664 = vmul.f32 %v651, %v660
      %v665 = vmul.f32 %v653, %v660
      %v666 = vmul.f32 %v655, %v660
      %v667 = vmul.f32 %v657, %v660
      %v668 = vmul.f32 %v659, %v660
      %v669 = vsub.f32 %v604, %v661
      %v670 = vsub.f32 %v609, %v662
      %v671 = vsub.f32 %v614, %v663
      %v672 = vsub.f32 %v619, %v664
      %v673 = vsub.f32 %v624, %v665
      %v674 = vsub.f32 %v629, %v666
      %v675 = vsub.f32 %v634, %v667
      %v676 = vsub.f32 %v639, %v668
      %v677 = vmul.f32 %v669, %v669
      %v678 = vmul.f32 %v670, %v670
      %v679 = vmul.f32 %v671, %v671
      %v680 = vmul.f32 %v672, %v672
      %v681 = vmul.f32 %v673, %v673
      %v682 = vmul.f32 %v674, %v674
      %v683 = vmul.f32 %v675, %v675
      %v684 = vmul.f32 %v676, %v676
      %685 = vadd.xlane.f32.xlu0 %v677
      %v686 = vpop.xlane.xlu0 %685
      %687 = vadd.xlane.f32.xlu0 %v678
      %v688 = vpop.xlane.xlu0 %687
      %689 = vadd.xlane.f32.xlu0 %v679
      %v690 = vpop.xlane.xlu0 %689
      %691 = vadd.xlane.f32.xlu0 %v680
      %v692 = vpop.xlane.xlu0 %691
      %693 = vadd.xlane.f32.xlu0 %v681
      %v694 = vpop.xlane.xlu0 %693
      %695 = vadd.xlane.f32.xlu0 %v682
      %v696 = vpop.xlane.xlu0 %695
      %697 = vadd.xlane.f32.xlu0 %v683
      %v698 = vpop.xlane.xlu0 %697
      %699 = vadd.xlane.f32.xlu0 %v684
      %v700 = vpop.xlane.xlu0 %699
      %v701 = vmul.f32 %v686, %v660
      %v702 = vmul.f32 %v688, %v660
      %v703 = vmul.f32 %v690, %v660
      %v704 = vmul.f32 %v692, %v660
      %v705 = vmul.f32 %v694, %v660
      %v706 = vmul.f32 %v696, %v660
      %v707 = vmul.f32 %v698, %v660
      %v708 = vmul.f32 %v700, %v660
      %v709 = vadd.f32 %v701, 1e-05
      %v710 = vadd.f32 %v702, 1e-05
      %v711 = vadd.f32 %v703, 1e-05
      %v712 = vadd.f32 %v704, 1e-05
      %v713 = vadd.f32 %v705, 1e-05
      %v714 = vadd.f32 %v706, 1e-05
      %v715 = vadd.f32 %v707, 1e-05
      %v716 = vadd.f32 %v708, 1e-05
      %v717 = vrsqrt.pop %v709
      %v718 = vrsqrt.pop %v710
      %v719 = vrsqrt.pop %v711
      %v720 = vrsqrt.pop %v712
      %v721 = vrsqrt.pop %v713
      %v722 = vrsqrt.pop %v714
      %v723 = vrsqrt.pop %v715
      %v724 = vrsqrt.pop %v716
      %v725 = vmul.f32 %v669, %v717
      %v726 = vmul.f32 %v670, %v718
      %v727 = vmul.f32 %v671, %v719
      %v728 = vmul.f32 %v672, %v720
      %v729 = vmul.f32 %v673, %v721
      %v730 = vmul.f32 %v674, %v722
      %v731 = vmul.f32 %v675, %v723
      %v732 = vmul.f32 %v676, %v724
      %v734 = vlaneseq
      %v735 = vshrl.u32 %v734, 7
      %v736 = vsub.s32 0, %v735
      %v737 = vrot.slane %v642, %v736
      %v739 = vmul.f32 %v725, %v737
      %v740 = vmul.f32 %v726, %v737
      %v741 = vmul.f32 %v727, %v737
      %v742 = vmul.f32 %v728, %v737
      %v743 = vmul.f32 %v729, %v737
      %v744 = vmul.f32 %v730, %v737
      %v745 = vmul.f32 %v731, %v737
      %v746 = vmul.f32 %v732, %v737
      %v748 = vlaneseq
      %v749 = vshrl.u32 %v748, 7
      %v750 = vsub.s32 0, %v749
      %v751 = vrot.slane %v643, %v750
      %v753 = vadd.f32 %v739, %v751
      %v754 = vadd.f32 %v740, %v751
      %v755 = vadd.f32 %v741, %v751
      %v756 = vadd.f32 %v742, %v751
      %v757 = vadd.f32 %v743, %v751
      %v758 = vadd.f32 %v744, %v751
      %v759 = vadd.f32 %v745, %v751
      %v760 = vadd.f32 %v746, %v751
      %v761 = vmul.f32 %v753, 0.5
      %v762 = vmul.f32 %v754, 0.5
      %v763 = vmul.f32 %v755, 0.5
      %v764 = vmul.f32 %v756, 0.5
      %v765 = vmul.f32 %v757, 0.5
      %v766 = vmul.f32 %v758, 0.5
      %v767 = vmul.f32 %v759, 0.5
      %v768 = vmul.f32 %v760, 0.5
      %v769 = vmul.f32 %v753, 0.70710677
      %v770 = vmul.f32 %v754, 0.70710677
      %v771 = vmul.f32 %v755, 0.70710677
      %v772 = vmul.f32 %v756, 0.70710677
      %v773 = vmul.f32 %v757, 0.70710677
      %v774 = vmul.f32 %v758, 0.70710677
      %v775 = vmul.f32 %v759, 0.70710677
      %v776 = vmul.f32 %v760, 0.70710677
      %v777 = vand.u32 2147483647, %v769
      %v778 = vand.u32 2147483647, %v770
      %v779 = vand.u32 2147483647, %v771
      %v780 = vand.u32 2147483647, %v772
      %v781 = vand.u32 2147483647, %v773
      %v782 = vand.u32 2147483647, %v774
      %v783 = vand.u32 2147483647, %v775
      %v784 = vand.u32 2147483647, %v776
      %v785 = vmul.f32 %v777, 0.3275911
      %v786 = vmul.f32 %v778, 0.3275911
      %v787 = vmul.f32 %v779, 0.3275911
      %v788 = vmul.f32 %v780, 0.3275911
      %v789 = vmul.f32 %v781, 0.3275911
      %v790 = vmul.f32 %v782, 0.3275911
      %v791 = vmul.f32 %v783, 0.3275911
      %v792 = vmul.f32 %v784, 0.3275911
      %v793 = vadd.f32 %v785, 1.0
      %v794 = vadd.f32 %v786, 1.0
      %v795 = vadd.f32 %v787, 1.0
      %v796 = vadd.f32 %v788, 1.0
      %v797 = vadd.f32 %v789, 1.0
      %v798 = vadd.f32 %v790, 1.0
      %v799 = vadd.f32 %v791, 1.0
      %v800 = vadd.f32 %v792, 1.0
      %v801 = vrcp.pop %v793
      %v802 = vmul.f32 1.0, %v801
      %v803 = vrcp.pop %v794
      %v804 = vmul.f32 1.0, %v803
      %v805 = vrcp.pop %v795
      %v806 = vmul.f32 1.0, %v805
      %v807 = vrcp.pop %v796
      %v808 = vmul.f32 1.0, %v807
      %v809 = vrcp.pop %v797
      %v810 = vmul.f32 1.0, %v809
      %v811 = vrcp.pop %v798
      %v812 = vmul.f32 1.0, %v811
      %v813 = vrcp.pop %v799
      %v814 = vmul.f32 1.0, %v813
      %v815 = vrcp.pop %v800
      %v816 = vmul.f32 1.0, %v815
      %v817 = vmul.f32 %v802, 1.0614054
      %v818 = vmul.f32 %v804, 1.0614054
      %v819 = vmul.f32 %v806, 1.0614054
      %v820 = vmul.f32 %v808, 1.0614054
      %v821 = vmul.f32 %v810, 1.0614054
      %v822 = vmul.f32 %v812, 1.0614054
      %v823 = vmul.f32 %v814, 1.0614054
      %v824 = vmul.f32 %v816, 1.0614054
      %v825 = vadd.f32 %v817, -1.4531521
      %v826 = vadd.f32 %v818, -1.4531521
      %v827 = vadd.f32 %v819, -1.4531521
      %v828 = vadd.f32 %v820, -1.4531521
      %v829 = vadd.f32 %v821, -1.4531521
      %v830 = vadd.f32 %v822, -1.4531521
      %v831 = vadd.f32 %v823, -1.4531521
      %v832 = vadd.f32 %v824, -1.4531521
      %v833 = vmul.f32 %v825, %v802
      %v834 = vmul.f32 %v826, %v804
      %v835 = vmul.f32 %v827, %v806
      %v836 = vmul.f32 %v828, %v808
      %v837 = vmul.f32 %v829, %v810
      %v838 = vmul.f32 %v830, %v812
      %v839 = vmul.f32 %v831, %v814
      %v840 = vmul.f32 %v832, %v816
      %v841 = vadd.f32 %v833, 1.4214138
      %v842 = vadd.f32 %v834, 1.4214138
      %v843 = vadd.f32 %v835, 1.4214138
      %v844 = vadd.f32 %v836, 1.4214138
      %v845 = vadd.f32 %v837, 1.4214138
      %v846 = vadd.f32 %v838, 1.4214138
      %v847 = vadd.f32 %v839, 1.4214138
      %v848 = vadd.f32 %v840, 1.4214138
      %v849 = vmul.f32 %v841, %v802
      %v850 = vmul.f32 %v842, %v804
      %v851 = vmul.f32 %v843, %v806
      %v852 = vmul.f32 %v844, %v808
      %v853 = vmul.f32 %v845, %v810
      %v854 = vmul.f32 %v846, %v812
      %v855 = vmul.f32 %v847, %v814
      %v856 = vmul.f32 %v848, %v816
      %v857 = vadd.f32 %v849, -0.28449672
      %v858 = vadd.f32 %v850, -0.28449672
      %v859 = vadd.f32 %v851, -0.28449672
      %v860 = vadd.f32 %v852, -0.28449672
      %v861 = vadd.f32 %v853, -0.28449672
      %v862 = vadd.f32 %v854, -0.28449672
      %v863 = vadd.f32 %v855, -0.28449672
      %v864 = vadd.f32 %v856, -0.28449672
      %v865 = vmul.f32 %v857, %v802
      %v866 = vmul.f32 %v858, %v804
      %v867 = vmul.f32 %v859, %v806
      %v868 = vmul.f32 %v860, %v808
      %v869 = vmul.f32 %v861, %v810
      %v870 = vmul.f32 %v862, %v812
      %v871 = vmul.f32 %v863, %v814
      %v872 = vmul.f32 %v864, %v816
      %v873 = vadd.f32 %v865, 0.2548296
      %v874 = vadd.f32 %v866, 0.2548296
      %v875 = vadd.f32 %v867, 0.2548296
      %v876 = vadd.f32 %v868, 0.2548296
      %v877 = vadd.f32 %v869, 0.2548296
      %v878 = vadd.f32 %v870, 0.2548296
      %v879 = vadd.f32 %v871, 0.2548296
      %v880 = vadd.f32 %v872, 0.2548296
      %v881 = vmul.f32 %v873, %v802
      %v882 = vmul.f32 %v874, %v804
      %v883 = vmul.f32 %v875, %v806
      %v884 = vmul.f32 %v876, %v808
      %v885 = vmul.f32 %v877, %v810
      %v886 = vmul.f32 %v878, %v812
      %v887 = vmul.f32 %v879, %v814
      %v888 = vmul.f32 %v880, %v816
      %v889 = vsub.f32 0.0, %v777
      %v890 = vsub.f32 0.0, %v778
      %v891 = vsub.f32 0.0, %v779
      %v892 = vsub.f32 0.0, %v780
      %v893 = vsub.f32 0.0, %v781
      %v894 = vsub.f32 0.0, %v782
      %v895 = vsub.f32 0.0, %v783
      %v896 = vsub.f32 0.0, %v784
      %v897 = vmul.f32 %v889, %v777
      %v898 = vmul.f32 %v890, %v778
      %v899 = vmul.f32 %v891, %v779
      %v900 = vmul.f32 %v892, %v780
      %v901 = vmul.f32 %v893, %v781
      %v902 = vmul.f32 %v894, %v782
      %v903 = vmul.f32 %v895, %v783
      %v904 = vmul.f32 %v896, %v784
      %v905 = vmul.f32 %v897, 1.442695
      %v906 = vpow.pop %v905
      %v907 = vmul.f32 %v898, 1.442695
      %v908 = vpow.pop %v907
      %v909 = vmul.f32 %v899, 1.442695
      %v910 = vpow.pop %v909
      %v911 = vmul.f32 %v900, 1.442695
      %v912 = vpow.pop %v911
      %v913 = vmul.f32 %v901, 1.442695
      %v914 = vpow.pop %v913
      %v915 = vmul.f32 %v902, 1.442695
      %v916 = vpow.pop %v915
      %v917 = vmul.f32 %v903, 1.442695
      %v918 = vpow.pop %v917
      %v919 = vmul.f32 %v904, 1.442695
      %v920 = vpow.pop %v919
      %v921 = vmul.f32 %v881, %v906
      %v922 = vmul.f32 %v882, %v908
      %v923 = vmul.f32 %v883, %v910
      %v924 = vmul.f32 %v884, %v912
      %v925 = vmul.f32 %v885, %v914
      %v926 = vmul.f32 %v886, %v916
      %v927 = vmul.f32 %v887, %v918
      %v928 = vmul.f32 %v888, %v920
      %v929 = vsub.f32 1.0, %v921
      %v930 = vsub.f32 1.0, %v922
      %v931 = vsub.f32 1.0, %v923
      %v932 = vsub.f32 1.0, %v924
      %v933 = vsub.f32 1.0, %v925
      %v934 = vsub.f32 1.0, %v926
      %v935 = vsub.f32 1.0, %v927
      %v936 = vsub.f32 1.0, %v928
      %vm937 = vcmp.lt.f32.partialorder %v769, 0.0
      %vm938 = vcmp.lt.f32.partialorder %v770, 0.0
      %vm939 = vcmp.lt.f32.partialorder %v771, 0.0
      %vm940 = vcmp.lt.f32.partialorder %v772, 0.0
      %vm941 = vcmp.lt.f32.partialorder %v773, 0.0
      %vm942 = vcmp.lt.f32.partialorder %v774, 0.0
      %vm943 = vcmp.lt.f32.partialorder %v775, 0.0
      %vm944 = vcmp.lt.f32.partialorder %v776, 0.0
      %v945 = vsub.f32 0.0, %v929
      %v946 = vsub.f32 0.0, %v930
      %v947 = vsub.f32 0.0, %v931
      %v948 = vsub.f32 0.0, %v932
      %v949 = vsub.f32 0.0, %v933
      %v950 = vsub.f32 0.0, %v934
      %v951 = vsub.f32 0.0, %v935
      %v952 = vsub.f32 0.0, %v936
      %v953 = vsel %vm937, %v945, %v929
      %v954 = vsel %vm938, %v946, %v930
      %v955 = vsel %vm939, %v947, %v931
      %v956 = vsel %vm940, %v948, %v932
      %v957 = vsel %vm941, %v949, %v933
      %v958 = vsel %vm942, %v950, %v934
      %v959 = vsel %vm943, %v951, %v935
      %v960 = vsel %vm944, %v952, %v936
      %v961 = vadd.f32 %v953, 1.0
      %v962 = vadd.f32 %v954, 1.0
      %v963 = vadd.f32 %v955, 1.0
      %v964 = vadd.f32 %v956, 1.0
      %v965 = vadd.f32 %v957, 1.0
      %v966 = vadd.f32 %v958, 1.0
      %v967 = vadd.f32 %v959, 1.0
      %v968 = vadd.f32 %v960, 1.0
      %v969 = vmul.f32 %v761, %v961
      %v970 = vmul.f32 %v762, %v962
      %v971 = vmul.f32 %v763, %v963
      %v972 = vmul.f32 %v764, %v964
      %v973 = vmul.f32 %v765, %v965
      %v974 = vmul.f32 %v766, %v966
      %v975 = vmul.f32 %v767, %v967
      %v976 = vmul.f32 %v768, %v968
      %v977 = vld [vmem:[%s6] sm:$0xff]
      %v978 = vld [vmem:[%s6 + $0x8] sm:$0xff]
      %v979 = vld [vmem:[%s6 + $0x10] sm:$0xff]
      %v980 = vld [vmem:[%s6 + $0x18] sm:$0xff]
      %v981 = vld [vmem:[%s6 + $0x20] sm:$0xff]
      %v982 = vld [vmem:[%s6 + $0x28] sm:$0xff]
      %v983 = vld [vmem:[%s6 + $0x30] sm:$0xff]
      %v984 = vld [vmem:[%s6 + $0x38] sm:$0xff]
      %v985 = vld [vmem:[%s6 + $0x40] sm:$0xff]
      %v986 = vld [vmem:[%s6 + $0x48] sm:$0xff]
      %v987 = vld [vmem:[%s6 + $0x50] sm:$0xff]
      %v988 = vld [vmem:[%s6 + $0x58] sm:$0xff]
      %v989 = vld [vmem:[%s6 + $0x60] sm:$0xff]
      %v990 = vld [vmem:[%s6 + $0x68] sm:$0xff]
      %v991 = vld [vmem:[%s6 + $0x70] sm:$0xff]
      %v992 = vld [vmem:[%s6 + $0x78] sm:$0xff]
      %v993 = vld [vmem:[%s7] sm:$0x1]
      %v995 = vlaneseq
      %v996 = vshrl.u32 %v995, 7
      %v997 = vsub.s32 0, %v996
      %v998 = vrot.slane %v993, %v997
      %1000 = vmatprep.subr.mxu0 0.0
      %1001 = vmatpush1.msra.mxu0 %v977
      %1002 = vmatprep.subr.mxu0 0.0
      %1003 = vmatpush1.msra.mxu0 %v978
      %1004 = vmatprep.subr.mxu0 0.0
      %1005 = vmatpush1.msra.mxu0 %v979
      %1006 = vmatprep.subr.mxu0 0.0
      %1007 = vmatpush1.msra.mxu0 %v980
      %1008 = vmatprep.subr.mxu0 0.0
      %1009 = vmatpush1.msra.mxu0 %v981
      %1010 = vmatprep.subr.mxu0 0.0
      %1011 = vmatpush1.msra.mxu0 %v982
      %1012 = vmatprep.subr.mxu0 0.0
      %1013 = vmatpush1.msra.mxu0 %v983
      %1014 = vmatprep.subr.mxu0 0.0
      %1015 = vmatpush1.msra.mxu0 %v984
      %1016 = vmatprep.subr.mxu0 0.0
      %1017 = vmatpush1.msra.mxu0 %v985
      %1018 = vmatprep.subr.mxu0 0.0
      %1019 = vmatpush1.msra.mxu0 %v986
      %1020 = vmatprep.subr.mxu0 0.0
      %1021 = vmatpush1.msra.mxu0 %v987
      %1022 = vmatprep.subr.mxu0 0.0
      %1023 = vmatpush1.msra.mxu0 %v988
      %1024 = vmatprep.subr.mxu0 0.0
      %1025 = vmatpush1.msra.mxu0 %v989
      %1026 = vmatprep.subr.mxu0 0.0
      %1027 = vmatpush1.msra.mxu0 %v990
      %1028 = vmatprep.subr.mxu0 0.0
      %1029 = vmatpush1.msra.mxu0 %v991
      %1030 = vmatprep.subr.mxu0 0.0
      %1031 = vmatpush1.msra.mxu0 %v992
      %1032 = vmatprep.subr.mxu0 0.0
      %1033 = vmatpush1.msra.mxu0 0.0
      %1034 = vmatprep.subr.mxu0 0.0
      %1035 = vmatpush1.msra.mxu0 0.0
      %1036 = vmatprep.subr.mxu0 0.0
      %1037 = vmatpush1.msra.mxu0 0.0
      %1038 = vmatprep.subr.mxu0 0.0
      %1039 = vmatpush1.msra.mxu0 0.0
      %1040 = vmatprep.subr.mxu0 0.0
      %1041 = vmatpush1.msra.mxu0 0.0
      %1042 = vmatprep.subr.mxu0 0.0
      %1043 = vmatpush1.msra.mxu0 0.0
      %1044 = vmatprep.subr.mxu0 0.0
      %1045 = vmatpush1.msra.mxu0 0.0
      %1046 = vmatprep.subr.mxu0 0.0
      %1047 = vmatpush1.msra.mxu0 0.0
      %1048 = vmatprep.subr.mxu0 0.0
      %1049 = vmatpush1.msra.mxu0 0.0
      %1050 = vmatprep.subr.mxu0 0.0
      %1051 = vmatpush1.msra.mxu0 0.0
      %1052 = vmatprep.subr.mxu0 0.0
      %1053 = vmatpush1.msra.mxu0 0.0
      %1054 = vmatprep.subr.mxu0 0.0
      %1055 = vmatpush1.msra.mxu0 0.0
      %1056 = vmatprep.subr.mxu0 0.0
      %1057 = vmatpush1.msra.mxu0 0.0
      %1058 = vmatprep.subr.mxu0 0.0
      %1059 = vmatpush1.msra.mxu0 0.0
      %1060 = vmatprep.subr.mxu0 0.0
      %1061 = vmatpush1.msra.mxu0 0.0
      %1062 = vmatprep.subr.mxu0 0.0
      %1063 = vmatpush1.msra.mxu0 0.0
      %1064 = vmatprep.mubr.f32.mxu0 0.0
      %1065 = vmatmul.mubr.f32.gmra.mrb[0].mxu0 %v969
      %v1066 = vpop.f32.mrb[0].mxu0
      %v1067 = vadd.f32 %v998, %v1066
      %v1068 = vpop.f32.mrb[0].mxu0
      %1069 = vmatprep.mubr.f32.mxu0 0.0
      %1070 = vmatmul.mubr.f32.gmra.mrb[0].mxu0 %v970
      %v1071 = vpop.f32.mrb[0].mxu0
      %v1072 = vadd.f32 %v998, %v1071
      %v1073 = vpop.f32.mrb[0].mxu0
      %1074 = vmatprep.mubr.f32.mxu0 0.0
      %1075 = vmatmul.mubr.f32.gmra.mrb[0].mxu0 %v971
      %v1076 = vpop.f32.mrb[0].mxu0
      %v1077 = vadd.f32 %v998, %v1076
      %v1078 = vpop.f32.mrb[0].mxu0
      %1079 = vmatprep.mubr.f32.mxu0 0.0
      %1080 = vmatmul.mubr.f32.gmra.mrb[0].mxu0 %v972
      %v1081 = vpop.f32.mrb[0].mxu0
      %v1082 = vadd.f32 %v998, %v1081
      %v1083 = vpop.f32.mrb[0].mxu0
      %1084 = vmatprep.mubr.f32.mxu0 0.0
      %1085 = vmatmul.mubr.f32.gmra.mrb[0].mxu0 %v973
      %v1086 = vpop.f32.mrb[0].mxu0
      %v1087 = vadd.f32 %v998, %v1086
      %v1088 = vpop.f32.mrb[0].mxu0
      %1089 = vmatprep.mubr.f32.mxu0 0.0
      %1090 = vmatmul.mubr.f32.gmra.mrb[0].mxu0 %v974
      %v1091 = vpop.f32.mrb[0].mxu0
      %v1092 = vadd.f32 %v998, %v1091
      %v1093 = vpop.f32.mrb[0].mxu0
      %1094 = vmatprep.mubr.f32.mxu0 0.0
      %1095 = vmatmul.mubr.f32.gmra.mrb[0].mxu0 %v975
      %v1096 = vpop.f32.mrb[0].mxu0
      %v1097 = vadd.f32 %v998, %v1096
      %v1098 = vpop.f32.mrb[0].mxu0
      %1099 = vmatprep.mubr.f32.mxu0 0.0
      %1100 = vmatmul.mubr.f32.gmra.mrb[0].mxu0 %v976
      %v1101 = vpop.f32.mrb[0].mxu0
      %v1102 = vadd.f32 %v998, %v1101
      %v1103 = vpop.f32.mrb[0].mxu0
      %1104 = vdwg.mxu0
      %v1105 = vld [vmem:[%s8] sm:$0x1]
      %v1106 = vld [vmem:[%s9] sm:$0x1]
      %1107 = vadd.xlane.f32.xlu0 %v1067
      %v1108 = vpop.xlane.xlu0 %1107
      %1109 = vadd.xlane.f32.xlu0 %v1072
      %v1110 = vpop.xlane.xlu0 %1109
      %1111 = vadd.xlane.f32.xlu0 %v1077
      %v1112 = vpop.xlane.xlu0 %1111
      %1113 = vadd.xlane.f32.xlu0 %v1082
      %v1114 = vpop.xlane.xlu0 %1113
      %1115 = vadd.xlane.f32.xlu0 %v1087
      %v1116 = vpop.xlane.xlu0 %1115
      %1117 = vadd.xlane.f32.xlu0 %v1092
      %v1118 = vpop.xlane.xlu0 %1117
      %1119 = vadd.xlane.f32.xlu0 %v1097
      %v1120 = vpop.xlane.xlu0 %1119
      %1121 = vadd.xlane.f32.xlu0 %v1102
      %v1122 = vpop.xlane.xlu0 %1121
      %v1123 = vmul.f32 %v1108, %v660
      %v1124 = vmul.f32 %v1110, %v660
      %v1125 = vmul.f32 %v1112, %v660
      %v1126 = vmul.f32 %v1114, %v660
      %v1127 = vmul.f32 %v1116, %v660
      %v1128 = vmul.f32 %v1118, %v660
      %v1129 = vmul.f32 %v1120, %v660
      %v1130 = vmul.f32 %v1122, %v660
      %v1131 = vsub.f32 %v1067, %v1123
      %v1132 = vsub.f32 %v1072, %v1124
      %v1133 = vsub.f32 %v1077, %v1125
      %v1134 = vsub.f32 %v1082, %v1126
      %v1135 = vsub.f32 %v1087, %v1127
      %v1136 = vsub.f32 %v1092, %v1128
      %v1137 = vsub.f32 %v1097, %v1129
      %v1138 = vsub.f32 %v1102, %v1130
      %v1139 = vmul.f32 %v1131, %v1131
      %v1140 = vmul.f32 %v1132, %v1132
      %v1141 = vmul.f32 %v1133, %v1133
      %v1142 = vmul.f32 %v1134, %v1134
      %v1143 = vmul.f32 %v1135, %v1135
      %v1144 = vmul.f32 %v1136, %v1136
      %v1145 = vmul.f32 %v1137, %v1137
      %v1146 = vmul.f32 %v1138, %v1138
      %1147 = vadd.xlane.f32.xlu0 %v1139
      %v1148 = vpop.xlane.xlu0 %1147
      %1149 = vadd.xlane.f32.xlu0 %v1140
      %v1150 = vpop.xlane.xlu0 %1149
      %1151 = vadd.xlane.f32.xlu0 %v1141
      %v1152 = vpop.xlane.xlu0 %1151
      %1153 = vadd.xlane.f32.xlu0 %v1142
      %v1154 = vpop.xlane.xlu0 %1153
      %1155 = vadd.xlane.f32.xlu0 %v1143
      %v1156 = vpop.xlane.xlu0 %1155
      %1157 = vadd.xlane.f32.xlu0 %v1144
      %v1158 = vpop.xlane.xlu0 %1157
      %1159 = vadd.xlane.f32.xlu0 %v1145
      %v1160 = vpop.xlane.xlu0 %1159
      %1161 = vadd.xlane.f32.xlu0 %v1146
      %v1162 = vpop.xlane.xlu0 %1161
      %v1163 = vmul.f32 %v1148, %v660
      %v1164 = vmul.f32 %v1150, %v660
      %v1165 = vmul.f32 %v1152, %v660
      %v1166 = vmul.f32 %v1154, %v660
      %v1167 = vmul.f32 %v1156, %v660
      %v1168 = vmul.f32 %v1158, %v660
      %v1169 = vmul.f32 %v1160, %v660
      %v1170 = vmul.f32 %v1162, %v660
      %v1171 = vadd.f32 %v1163, 1e-05
      %v1172 = vadd.f32 %v1164, 1e-05
      %v1173 = vadd.f32 %v1165, 1e-05
      %v1174 = vadd.f32 %v1166, 1e-05
      %v1175 = vadd.f32 %v1167, 1e-05
      %v1176 = vadd.f32 %v1168, 1e-05
      %v1177 = vadd.f32 %v1169, 1e-05
      %v1178 = vadd.f32 %v1170, 1e-05
      %v1179 = vrsqrt.pop %v1171
      %v1180 = vrsqrt.pop %v1172
      %v1181 = vrsqrt.pop %v1173
      %v1182 = vrsqrt.pop %v1174
      %v1183 = vrsqrt.pop %v1175
      %v1184 = vrsqrt.pop %v1176
      %v1185 = vrsqrt.pop %v1177
      %v1186 = vrsqrt.pop %v1178
      %v1187 = vmul.f32 %v1131, %v1179
      %v1188 = vmul.f32 %v1132, %v1180
      %v1189 = vmul.f32 %v1133, %v1181
      %v1190 = vmul.f32 %v1134, %v1182
      %v1191 = vmul.f32 %v1135, %v1183
      %v1192 = vmul.f32 %v1136, %v1184
      %v1193 = vmul.f32 %v1137, %v1185
      %v1194 = vmul.f32 %v1138, %v1186
      %v1196 = vlaneseq
      %v1197 = vshrl.u32 %v1196, 7
      %v1198 = vsub.s32 0, %v1197
      %v1199 = vrot.slane %v1105, %v1198
      %v1201 = vmul.f32 %v1187, %v1199
      %v1202 = vmul.f32 %v1188, %v1199
      %v1203 = vmul.f32 %v1189, %v1199
      %v1204 = vmul.f32 %v1190, %v1199
      %v1205 = vmul.f32 %v1191, %v1199
      %v1206 = vmul.f32 %v1192, %v1199
      %v1207 = vmul.f32 %v1193, %v1199
      %v1208 = vmul.f32 %v1194, %v1199
      %v1210 = vlaneseq
      %v1211 = vshrl.u32 %v1210, 7
      %v1212 = vsub.s32 0, %v1211
      %v1213 = vrot.slane %v1106, %v1212
      %v1215 = vadd.f32 %v1201, %v1213
      %v1216 = vadd.f32 %v1202, %v1213
      %v1217 = vadd.f32 %v1203, %v1213
      %v1218 = vadd.f32 %v1204, %v1213
      %v1219 = vadd.f32 %v1205, %v1213
      %v1220 = vadd.f32 %v1206, %v1213
      %v1221 = vadd.f32 %v1207, %v1213
      %v1222 = vadd.f32 %v1208, %v1213
      %v1223 = vmul.f32 %v1215, 0.5
      %v1224 = vmul.f32 %v1216, 0.5
      %v1225 = vmul.f32 %v1217, 0.5
      %v1226 = vmul.f32 %v1218, 0.5
      %v1227 = vmul.f32 %v1219, 0.5
      %v1228 = vmul.f32 %v1220, 0.5
      %v1229 = vmul.f32 %v1221, 0.5
      %v1230 = vmul.f32 %v1222, 0.5
      %v1231 = vmul.f32 %v1215, 0.70710677
      %v1232 = vmul.f32 %v1216, 0.70710677
      %v1233 = vmul.f32 %v1217, 0.70710677
      %v1234 = vmul.f32 %v1218, 0.70710677
      %v1235 = vmul.f32 %v1219, 0.70710677
      %v1236 = vmul.f32 %v1220, 0.70710677
      %v1237 = vmul.f32 %v1221, 0.70710677
      %v1238 = vmul.f32 %v1222, 0.70710677
      %v1239 = vand.u32 2147483647, %v1231
      %v1240 = vand.u32 2147483647, %v1232
      %v1241 = vand.u32 2147483647, %v1233
      %v1242 = vand.u32 2147483647, %v1234
      %v1243 = vand.u32 2147483647, %v1235
      %v1244 = vand.u32 2147483647, %v1236
      %v1245 = vand.u32 2147483647, %v1237
      %v1246 = vand.u32 2147483647, %v1238
      %v1247 = vmul.f32 %v1239, 0.3275911
      %v1248 = vmul.f32 %v1240, 0.3275911
      %v1249 = vmul.f32 %v1241, 0.3275911
      %v1250 = vmul.f32 %v1242, 0.3275911
      %v1251 = vmul.f32 %v1243, 0.3275911
      %v1252 = vmul.f32 %v1244, 0.3275911
      %v1253 = vmul.f32 %v1245, 0.3275911
      %v1254 = vmul.f32 %v1246, 0.3275911
      %v1255 = vadd.f32 %v1247, 1.0
      %v1256 = vadd.f32 %v1248, 1.0
      %v1257 = vadd.f32 %v1249, 1.0
      %v1258 = vadd.f32 %v1250, 1.0
      %v1259 = vadd.f32 %v1251, 1.0
      %v1260 = vadd.f32 %v1252, 1.0
      %v1261 = vadd.f32 %v1253, 1.0
      %v1262 = vadd.f32 %v1254, 1.0
      %v1263 = vrcp.pop %v1255
      %v1264 = vmul.f32 1.0, %v1263
      %v1265 = vrcp.pop %v1256
      %v1266 = vmul.f32 1.0, %v1265
      %v1267 = vrcp.pop %v1257
      %v1268 = vmul.f32 1.0, %v1267
      %v1269 = vrcp.pop %v1258
      %v1270 = vmul.f32 1.0, %v1269
      %v1271 = vrcp.pop %v1259
      %v1272 = vmul.f32 1.0, %v1271
      %v1273 = vrcp.pop %v1260
      %v1274 = vmul.f32 1.0, %v1273
      %v1275 = vrcp.pop %v1261
      %v1276 = vmul.f32 1.0, %v1275
      %v1277 = vrcp.pop %v1262
      %v1278 = vmul.f32 1.0, %v1277
      %v1279 = vmul.f32 %v1264, 1.0614054
      %v1280 = vmul.f32 %v1266, 1.0614054
      %v1281 = vmul.f32 %v1268, 1.0614054
      %v1282 = vmul.f32 %v1270, 1.0614054
      %v1283 = vmul.f32 %v1272, 1.0614054
      %v1284 = vmul.f32 %v1274, 1.0614054
      %v1285 = vmul.f32 %v1276, 1.0614054
      %v1286 = vmul.f32 %v1278, 1.0614054
      %v1287 = vadd.f32 %v1279, -1.4531521
      %v1288 = vadd.f32 %v1280, -1.4531521
      %v1289 = vadd.f32 %v1281, -1.4531521
      %v1290 = vadd.f32 %v1282, -1.4531521
      %v1291 = vadd.f32 %v1283, -1.4531521
      %v1292 = vadd.f32 %v1284, -1.4531521
      %v1293 = vadd.f32 %v1285, -1.4531521
      %v1294 = vadd.f32 %v1286, -1.4531521
      %v1295 = vmul.f32 %v1287, %v1264
      %v1296 = vmul.f32 %v1288, %v1266
      %v1297 = vmul.f32 %v1289, %v1268
      %v1298 = vmul.f32 %v1290, %v1270
      %v1299 = vmul.f32 %v1291, %v1272
      %v1300 = vmul.f32 %v1292, %v1274
      %v1301 = vmul.f32 %v1293, %v1276
      %v1302 = vmul.f32 %v1294, %v1278
      %v1303 = vadd.f32 %v1295, 1.4214138
      %v1304 = vadd.f32 %v1296, 1.4214138
      %v1305 = vadd.f32 %v1297, 1.4214138
      %v1306 = vadd.f32 %v1298, 1.4214138
      %v1307 = vadd.f32 %v1299, 1.4214138
      %v1308 = vadd.f32 %v1300, 1.4214138
      %v1309 = vadd.f32 %v1301, 1.4214138
      %v1310 = vadd.f32 %v1302, 1.4214138
      %v1311 = vmul.f32 %v1303, %v1264
      %v1312 = vmul.f32 %v1304, %v1266
      %v1313 = vmul.f32 %v1305, %v1268
      %v1314 = vmul.f32 %v1306, %v1270
      %v1315 = vmul.f32 %v1307, %v1272
      %v1316 = vmul.f32 %v1308, %v1274
      %v1317 = vmul.f32 %v1309, %v1276
      %v1318 = vmul.f32 %v1310, %v1278
      %v1319 = vadd.f32 %v1311, -0.28449672
      %v1320 = vadd.f32 %v1312, -0.28449672
      %v1321 = vadd.f32 %v1313, -0.28449672
      %v1322 = vadd.f32 %v1314, -0.28449672
      %v1323 = vadd.f32 %v1315, -0.28449672
      %v1324 = vadd.f32 %v1316, -0.28449672
      %v1325 = vadd.f32 %v1317, -0.28449672
      %v1326 = vadd.f32 %v1318, -0.28449672
      %v1327 = vmul.f32 %v1319, %v1264
      %v1328 = vmul.f32 %v1320, %v1266
      %v1329 = vmul.f32 %v1321, %v1268
      %v1330 = vmul.f32 %v1322, %v1270
      %v1331 = vmul.f32 %v1323, %v1272
      %v1332 = vmul.f32 %v1324, %v1274
      %v1333 = vmul.f32 %v1325, %v1276
      %v1334 = vmul.f32 %v1326, %v1278
      %v1335 = vadd.f32 %v1327, 0.2548296
      %v1336 = vadd.f32 %v1328, 0.2548296
      %v1337 = vadd.f32 %v1329, 0.2548296
      %v1338 = vadd.f32 %v1330, 0.2548296
      %v1339 = vadd.f32 %v1331, 0.2548296
      %v1340 = vadd.f32 %v1332, 0.2548296
      %v1341 = vadd.f32 %v1333, 0.2548296
      %v1342 = vadd.f32 %v1334, 0.2548296
      %v1343 = vmul.f32 %v1335, %v1264
      %v1344 = vmul.f32 %v1336, %v1266
      %v1345 = vmul.f32 %v1337, %v1268
      %v1346 = vmul.f32 %v1338, %v1270
      %v1347 = vmul.f32 %v1339, %v1272
      %v1348 = vmul.f32 %v1340, %v1274
      %v1349 = vmul.f32 %v1341, %v1276
      %v1350 = vmul.f32 %v1342, %v1278
      %v1351 = vsub.f32 0.0, %v1239
      %v1352 = vsub.f32 0.0, %v1240
      %v1353 = vsub.f32 0.0, %v1241
      %v1354 = vsub.f32 0.0, %v1242
      %v1355 = vsub.f32 0.0, %v1243
      %v1356 = vsub.f32 0.0, %v1244
      %v1357 = vsub.f32 0.0, %v1245
      %v1358 = vsub.f32 0.0, %v1246
      %v1359 = vmul.f32 %v1351, %v1239
      %v1360 = vmul.f32 %v1352, %v1240
      %v1361 = vmul.f32 %v1353, %v1241
      %v1362 = vmul.f32 %v1354, %v1242
      %v1363 = vmul.f32 %v1355, %v1243
      %v1364 = vmul.f32 %v1356, %v1244
      %v1365 = vmul.f32 %v1357, %v1245
      %v1366 = vmul.f32 %v1358, %v1246
      %v1367 = vmul.f32 %v1359, 1.442695
      %v1368 = vpow.pop %v1367
      %v1369 = vmul.f32 %v1360, 1.442695
      %v1370 = vpow.pop %v1369
      %v1371 = vmul.f32 %v1361, 1.442695
      %v1372 = vpow.pop %v1371
      %v1373 = vmul.f32 %v1362, 1.442695
      %v1374 = vpow.pop %v1373
      %v1375 = vmul.f32 %v1363, 1.442695
      %v1376 = vpow.pop %v1375
      %v1377 = vmul.f32 %v1364, 1.442695
      %v1378 = vpow.pop %v1377
      %v1379 = vmul.f32 %v1365, 1.442695
      %v1380 = vpow.pop %v1379
      %v1381 = vmul.f32 %v1366, 1.442695
      %v1382 = vpow.pop %v1381
      %v1383 = vmul.f32 %v1343, %v1368
      %v1384 = vmul.f32 %v1344, %v1370
      %v1385 = vmul.f32 %v1345, %v1372
      %v1386 = vmul.f32 %v1346, %v1374
      %v1387 = vmul.f32 %v1347, %v1376
      %v1388 = vmul.f32 %v1348, %v1378
      %v1389 = vmul.f32 %v1349, %v1380
      %v1390 = vmul.f32 %v1350, %v1382
      %v1391 = vsub.f32 1.0, %v1383
      %v1392 = vsub.f32 1.0, %v1384
      %v1393 = vsub.f32 1.0, %v1385
      %v1394 = vsub.f32 1.0, %v1386
      %v1395 = vsub.f32 1.0, %v1387
      %v1396 = vsub.f32 1.0, %v1388
      %v1397 = vsub.f32 1.0, %v1389
      %v1398 = vsub.f32 1.0, %v1390
      %vm1399 = vcmp.lt.f32.partialorder %v1231, 0.0
      %vm1400 = vcmp.lt.f32.partialorder %v1232, 0.0
      %vm1401 = vcmp.lt.f32.partialorder %v1233, 0.0
      %vm1402 = vcmp.lt.f32.partialorder %v1234, 0.0
      %vm1403 = vcmp.lt.f32.partialorder %v1235, 0.0
      %vm1404 = vcmp.lt.f32.partialorder %v1236, 0.0
      %vm1405 = vcmp.lt.f32.partialorder %v1237, 0.0
      %vm1406 = vcmp.lt.f32.partialorder %v1238, 0.0
      %v1407 = vsub.f32 0.0, %v1391
      %v1408 = vsub.f32 0.0, %v1392
      %v1409 = vsub.f32 0.0, %v1393
      %v1410 = vsub.f32 0.0, %v1394
      %v1411 = vsub.f32 0.0, %v1395
      %v1412 = vsub.f32 0.0, %v1396
      %v1413 = vsub.f32 0.0, %v1397
      %v1414 = vsub.f32 0.0, %v1398
      %v1415 = vsel %vm1399, %v1407, %v1391
      %v1416 = vsel %vm1400, %v1408, %v1392
      %v1417 = vsel %vm1401, %v1409, %v1393
      %v1418 = vsel %vm1402, %v1410, %v1394
      %v1419 = vsel %vm1403, %v1411, %v1395
      %v1420 = vsel %vm1404, %v1412, %v1396
      %v1421 = vsel %vm1405, %v1413, %v1397
      %v1422 = vsel %vm1406, %v1414, %v1398
      %v1423 = vadd.f32 %v1415, 1.0
      %v1424 = vadd.f32 %v1416, 1.0
      %v1425 = vadd.f32 %v1417, 1.0
      %v1426 = vadd.f32 %v1418, 1.0
      %v1427 = vadd.f32 %v1419, 1.0
      %v1428 = vadd.f32 %v1420, 1.0
      %v1429 = vadd.f32 %v1421, 1.0
      %v1430 = vadd.f32 %v1422, 1.0
      %v1431 = vmul.f32 %v1223, %v1423
      %v1432 = vmul.f32 %v1224, %v1424
      %v1433 = vmul.f32 %v1225, %v1425
      %v1434 = vmul.f32 %v1226, %v1426
      %v1435 = vmul.f32 %v1227, %v1427
      %v1436 = vmul.f32 %v1228, %v1428
      %v1437 = vmul.f32 %v1229, %v1429
      %v1438 = vmul.f32 %v1230, %v1430
      %v1439 = vld [vmem:[%s10] sm:$0xff]
      %v1440 = vld [vmem:[%s10 + $0x8] sm:$0xff]
      %v1441 = vld [vmem:[%s10 + $0x10] sm:$0xff]
      %v1442 = vld [vmem:[%s10 + $0x18] sm:$0xff]
      %v1443 = vld [vmem:[%s10 + $0x20] sm:$0xff]
      %v1444 = vld [vmem:[%s10 + $0x28] sm:$0xff]
      %v1445 = vld [vmem:[%s10 + $0x30] sm:$0xff]
      %v1446 = vld [vmem:[%s10 + $0x38] sm:$0xff]
      %v1447 = vld [vmem:[%s10 + $0x40] sm:$0xff]
      %v1448 = vld [vmem:[%s10 + $0x48] sm:$0xff]
      %v1449 = vld [vmem:[%s10 + $0x50] sm:$0xff]
      %v1450 = vld [vmem:[%s10 + $0x58] sm:$0xff]
      %v1451 = vld [vmem:[%s10 + $0x60] sm:$0xff]
      %v1452 = vld [vmem:[%s10 + $0x68] sm:$0xff]
      %v1453 = vld [vmem:[%s10 + $0x70] sm:$0xff]
      %v1454 = vld [vmem:[%s10 + $0x78] sm:$0xff]
      %v1455 = vld [vmem:[%s11] sm:$0x1]
      %v1457 = vlaneseq
      %v1458 = vshrl.u32 %v1457, 7
      %v1459 = vsub.s32 0, %v1458
      %v1460 = vrot.slane %v1455, %v1459
      %1462 = vmatprep.subr.mxu0 0.0
      %1463 = vmatpush1.msra.mxu0 %v1439
      %1464 = vmatprep.subr.mxu0 0.0
      %1465 = vmatpush1.msra.mxu0 %v1440
      %1466 = vmatprep.subr.mxu0 0.0
      %1467 = vmatpush1.msra.mxu0 %v1441
      %1468 = vmatprep.subr.mxu0 0.0
      %1469 = vmatpush1.msra.mxu0 %v1442
      %1470 = vmatprep.subr.mxu0 0.0
      %1471 = vmatpush1.msra.mxu0 %v1443
      %1472 = vmatprep.subr.mxu0 0.0
      %1473 = vmatpush1.msra.mxu0 %v1444
      %1474 = vmatprep.subr.mxu0 0.0
      %1475 = vmatpush1.msra.mxu0 %v1445
      %1476 = vmatprep.subr.mxu0 0.0
      %1477 = vmatpush1.msra.mxu0 %v1446
      %1478 = vmatprep.subr.mxu0 0.0
      %1479 = vmatpush1.msra.mxu0 %v1447
      %1480 = vmatprep.subr.mxu0 0.0
      %1481 = vmatpush1.msra.mxu0 %v1448
      %1482 = vmatprep.subr.mxu0 0.0
      %1483 = vmatpush1.msra.mxu0 %v1449
      %1484 = vmatprep.subr.mxu0 0.0
      %1485 = vmatpush1.msra.mxu0 %v1450
      %1486 = vmatprep.subr.mxu0 0.0
      %1487 = vmatpush1.msra.mxu0 %v1451
      %1488 = vmatprep.subr.mxu0 0.0
      %1489 = vmatpush1.msra.mxu0 %v1452
      %1490 = vmatprep.subr.mxu0 0.0
      %1491 = vmatpush1.msra.mxu0 %v1453
      %1492 = vmatprep.subr.mxu0 0.0
      %1493 = vmatpush1.msra.mxu0 %v1454
      %1494 = vmatprep.subr.mxu0 0.0
      %1495 = vmatpush1.msra.mxu0 0.0
      %1496 = vmatprep.subr.mxu0 0.0
      %1497 = vmatpush1.msra.mxu0 0.0
      %1498 = vmatprep.subr.mxu0 0.0
      %1499 = vmatpush1.msra.mxu0 0.0
      %1500 = vmatprep.subr.mxu0 0.0
      %1501 = vmatpush1.msra.mxu0 0.0
      %1502 = vmatprep.subr.mxu0 0.0
      %1503 = vmatpush1.msra.mxu0 0.0
      %1504 = vmatprep.subr.mxu0 0.0
      %1505 = vmatpush1.msra.mxu0 0.0
      %1506 = vmatprep.subr.mxu0 0.0
      %1507 = vmatpush1.msra.mxu0 0.0
      %1508 = vmatprep.subr.mxu0 0.0
      %1509 = vmatpush1.msra.mxu0 0.0
      %1510 = vmatprep.subr.mxu0 0.0
      %1511 = vmatpush1.msra.mxu0 0.0
      %1512 = vmatprep.subr.mxu0 0.0
      %1513 = vmatpush1.msra.mxu0 0.0
      %1514 = vmatprep.subr.mxu0 0.0
      %1515 = vmatpush1.msra.mxu0 0.0
      %1516 = vmatprep.subr.mxu0 0.0
      %1517 = vmatpush1.msra.mxu0 0.0
      %1518 = vmatprep.subr.mxu0 0.0
      %1519 = vmatpush1.msra.mxu0 0.0
      %1520 = vmatprep.subr.mxu0 0.0
      %1521 = vmatpush1.msra.mxu0 0.0
      %1522 = vmatprep.subr.mxu0 0.0
      %1523 = vmatpush1.msra.mxu0 0.0
      %1524 = vmatprep.subr.mxu0 0.0
      %1525 = vmatpush1.msra.mxu0 0.0
      %1526 = vmatprep.mubr.f32.mxu0 0.0
      %1527 = vmatmul.mubr.f32.gmra.mrb[0].mxu0 %v1431
      %v1528 = vpop.f32.mrb[0].mxu0
      %v1529 = vadd.f32 %v1460, %v1528
      %v1530 = vpop.f32.mrb[0].mxu0
      %1531 = vmatprep.mubr.f32.mxu0 0.0
      %1532 = vmatmul.mubr.f32.gmra.mrb[0].mxu0 %v1432
      %v1533 = vpop.f32.mrb[0].mxu0
      %v1534 = vadd.f32 %v1460, %v1533
      %v1535 = vpop.f32.mrb[0].mxu0
      %1536 = vmatprep.mubr.f32.mxu0 0.0
      %1537 = vmatmul.mubr.f32.gmra.mrb[0].mxu0 %v1433
      %v1538 = vpop.f32.mrb[0].mxu0
      %v1539 = vadd.f32 %v1460, %v1538
      %v1540 = vpop.f32.mrb[0].mxu0
      %1541 = vmatprep.mubr.f32.mxu0 0.0
      %1542 = vmatmul.mubr.f32.gmra.mrb[0].mxu0 %v1434
      %v1543 = vpop.f32.mrb[0].mxu0
      %v1544 = vadd.f32 %v1460, %v1543
      %v1545 = vpop.f32.mrb[0].mxu0
      %1546 = vmatprep.mubr.f32.mxu0 0.0
      %1547 = vmatmul.mubr.f32.gmra.mrb[0].mxu0 %v1435
      %v1548 = vpop.f32.mrb[0].mxu0
      %v1549 = vadd.f32 %v1460, %v1548
      %v1550 = vpop.f32.mrb[0].mxu0
      %1551 = vmatprep.mubr.f32.mxu0 0.0
      %1552 = vmatmul.mubr.f32.gmra.mrb[0].mxu0 %v1436
      %v1553 = vpop.f32.mrb[0].mxu0
      %v1554 = vadd.f32 %v1460, %v1553
      %v1555 = vpop.f32.mrb[0].mxu0
      %1556 = vmatprep.mubr.f32.mxu0 0.0
      %1557 = vmatmul.mubr.f32.gmra.mrb[0].mxu0 %v1437
      %v1558 = vpop.f32.mrb[0].mxu0
      %v1559 = vadd.f32 %v1460, %v1558
      %v1560 = vpop.f32.mrb[0].mxu0
      %1561 = vmatprep.mubr.f32.mxu0 0.0
      %1562 = vmatmul.mubr.f32.gmra.mrb[0].mxu0 %v1438
      %v1563 = vpop.f32.mrb[0].mxu0
      %v1564 = vadd.f32 %v1460, %v1563
      %v1565 = vpop.f32.mrb[0].mxu0
      %1566 = vdwg.mxu0
      %v1567 = vld [vmem:[%s485] sm:$0xff]
      %v1568 = vld [vmem:[%s485 + $0x8] sm:$0xff]
      %v1569 = vld [vmem:[%s485 + $0x10] sm:$0xff]
      %v1570 = vld [vmem:[%s485 + $0x18] sm:$0xff]
      %v1571 = vld [vmem:[%s485 + $0x20] sm:$0xff]
      %v1572 = vld [vmem:[%s485 + $0x28] sm:$0xff]
      %v1573 = vld [vmem:[%s485 + $0x30] sm:$0xff]
      %v1574 = vld [vmem:[%s485 + $0x38] sm:$0xff]
      %v1575 = vld [vmem:[%s12] sm:$0xff]
      %v1576 = vld [vmem:[%s12 + $0x8] sm:$0xff]
      %v1577 = vld [vmem:[%s12 + $0x10] sm:$0xf]
      %v1578 = vld [vmem:[%s12 + $0x18] sm:$0xf]
      %vm1579 = vcmask 97280
      %v1581 = vsel %vm1579, %v1567, 0
      %v1584 = vsel %vm1579, %v1568, 0
      %v1587 = vsel %vm1579, %v1569, 0
      %v1590 = vsel %vm1579, %v1570, 0
      %v1593 = vsel %vm1579, %v1571, 0
      %v1596 = vsel %vm1579, %v1572, 0
      %v1599 = vsel %vm1579, %v1573, 0
      %v1602 = vsel %vm1579, %v1574, 0
      %vm1604 = vcmask 1043456
      %v1606 = vsel %vm1604, %v1577, 0
      %v1609 = vsel %vm1604, %v1578, 0
      %1611 = vmatprep.subr.mxu0 %v1576
      %1612 = vmatpush1.msra.mxu0 %v1575
      %1613 = vmatprep.subr.mxu0 %v1609
      %1614 = vmatpush1.msra.mxu0 %v1606
      %1615 = vmatprep.subr.mxu0 0.0
      %1616 = vmatpush1.msra.mxu0 0.0
      %1617 = vmatprep.subr.mxu0 0.0
      %1618 = vmatpush1.msra.mxu0 0.0
      %1619 = vmatprep.subr.mxu0 0.0
      %1620 = vmatpush1.msra.mxu0 0.0
      %1621 = vmatprep.subr.mxu0 0.0
      %1622 = vmatpush1.msra.mxu0 0.0
      %1623 = vmatprep.subr.mxu0 0.0
      %1624 = vmatpush1.msra.mxu0 0.0
      %1625 = vmatprep.subr.mxu0 0.0
      %1626 = vmatpush1.msra.mxu0 0.0
      %1627 = vmatprep.subr.mxu0 0.0
      %1628 = vmatpush1.msra.mxu0 0.0
      %1629 = vmatprep.subr.mxu0 0.0
      %1630 = vmatpush1.msra.mxu0 0.0
      %1631 = vmatprep.subr.mxu0 0.0
      %1632 = vmatpush1.msra.mxu0 0.0
      %1633 = vmatprep.subr.mxu0 0.0
      %1634 = vmatpush1.msra.mxu0 0.0
      %1635 = vmatprep.subr.mxu0 0.0
      %1636 = vmatpush1.msra.mxu0 0.0
      %1637 = vmatprep.subr.mxu0 0.0
      %1638 = vmatpush1.msra.mxu0 0.0
      %1639 = vmatprep.subr.mxu0 0.0
      %1640 = vmatpush1.msra.mxu0 0.0
      %1641 = vmatprep.subr.mxu0 0.0
      %1642 = vmatpush1.msra.mxu0 0.0
      %1643 = vmatprep.subr.mxu0 0.0
      %1644 = vmatpush1.msra.mxu0 0.0
      %1645 = vmatprep.subr.mxu0 0.0
      %1646 = vmatpush1.msra.mxu0 0.0
      %1647 = vmatprep.subr.mxu0 0.0
      %1648 = vmatpush1.msra.mxu0 0.0
      %1649 = vmatprep.subr.mxu0 0.0
      %1650 = vmatpush1.msra.mxu0 0.0
      %1651 = vmatprep.subr.mxu0 0.0
      %1652 = vmatpush1.msra.mxu0 0.0
      %1653 = vmatprep.subr.mxu0 0.0
      %1654 = vmatpush1.msra.mxu0 0.0
      %1655 = vmatprep.subr.mxu0 0.0
      %1656 = vmatpush1.msra.mxu0 0.0
      %1657 = vmatprep.subr.mxu0 0.0
      %1658 = vmatpush1.msra.mxu0 0.0
      %1659 = vmatprep.subr.mxu0 0.0
      %1660 = vmatpush1.msra.mxu0 0.0
      %1661 = vmatprep.subr.mxu0 0.0
      %1662 = vmatpush1.msra.mxu0 0.0
      %1663 = vmatprep.subr.mxu0 0.0
      %1664 = vmatpush1.msra.mxu0 0.0
      %1665 = vmatprep.subr.mxu0 0.0
      %1666 = vmatpush1.msra.mxu0 0.0
      %1667 = vmatprep.subr.mxu0 0.0
      %1668 = vmatpush1.msra.mxu0 0.0
      %1669 = vmatprep.subr.mxu0 0.0
      %1670 = vmatpush1.msra.mxu0 0.0
      %1671 = vmatprep.subr.mxu0 0.0
      %1672 = vmatpush1.msra.mxu0 0.0
      %1673 = vmatprep.subr.mxu0 0.0
      %1674 = vmatpush1.msra.mxu0 0.0
      %1675 = vmatprep.mubr.f32.mxu0 0.0
      %1676 = vmatmul.mubr.f32.gmra.mrb[0].mxu0 %v1581
      %v1677 = vpop.f32.mrb[0].mxu0
      %v1678 = vadd.f32 0.0, %v1677
      %v1679 = vpop.f32.mrb[0].mxu0
      %v1680 = vadd.f32 0.0, %v1679
      %1681 = vmatprep.mubr.f32.mxu0 0.0
      %1682 = vmatmul.mubr.f32.gmra.mrb[0].mxu0 %v1584
      %v1683 = vpop.f32.mrb[0].mxu0
      %v1684 = vadd.f32 0.0, %v1683
      %v1685 = vpop.f32.mrb[0].mxu0
      %v1686 = vadd.f32 0.0, %v1685
      %1687 = vmatprep.mubr.f32.mxu0 0.0
      %1688 = vmatmul.mubr.f32.gmra.mrb[0].mxu0 %v1587
      %v1689 = vpop.f32.mrb[0].mxu0
      %v1690 = vadd.f32 0.0, %v1689
      %v1691 = vpop.f32.mrb[0].mxu0
      %v1692 = vadd.f32 0.0, %v1691
      %1693 = vmatprep.mubr.f32.mxu0 0.0
      %1694 = vmatmul.mubr.f32.gmra.mrb[0].mxu0 %v1590
      %v1695 = vpop.f32.mrb[0].mxu0
      %v1696 = vadd.f32 0.0, %v1695
      %v1697 = vpop.f32.mrb[0].mxu0
      %v1698 = vadd.f32 0.0, %v1697
      %1699 = vmatprep.mubr.f32.mxu0 0.0
      %1700 = vmatmul.mubr.f32.gmra.mrb[0].mxu0 %v1593
      %v1701 = vpop.f32.mrb[0].mxu0
      %v1702 = vadd.f32 0.0, %v1701
      %v1703 = vpop.f32.mrb[0].mxu0
      %v1704 = vadd.f32 0.0, %v1703
      %1705 = vmatprep.mubr.f32.mxu0 0.0
      %1706 = vmatmul.mubr.f32.gmra.mrb[0].mxu0 %v1596
      %v1707 = vpop.f32.mrb[0].mxu0
      %v1708 = vadd.f32 0.0, %v1707
      %v1709 = vpop.f32.mrb[0].mxu0
      %v1710 = vadd.f32 0.0, %v1709
      %1711 = vmatprep.mubr.f32.mxu0 0.0
      %1712 = vmatmul.mubr.f32.gmra.mrb[0].mxu0 %v1599
      %v1713 = vpop.f32.mrb[0].mxu0
      %v1714 = vadd.f32 0.0, %v1713
      %v1715 = vpop.f32.mrb[0].mxu0
      %v1716 = vadd.f32 0.0, %v1715
      %1717 = vmatprep.mubr.f32.mxu0 0.0
      %1718 = vmatmul.mubr.f32.gmra.mrb[0].mxu0 %v1602
      %v1719 = vpop.f32.mrb[0].mxu0
      %v1720 = vadd.f32 0.0, %v1719
      %v1721 = vpop.f32.mrb[0].mxu0
      %v1722 = vadd.f32 0.0, %v1721
      %1723 = vdwg.mxu0
      %v1724 = vmul.f32 %v1529, %v1678
      %v1725 = vmul.f32 %v1534, %v1684
      %v1726 = vmul.f32 %v1539, %v1690
      %v1727 = vmul.f32 %v1544, %v1696
      %v1728 = vmul.f32 %v1549, %v1702
      %v1729 = vmul.f32 %v1554, %v1708
      %v1730 = vmul.f32 %v1559, %v1714
      %v1731 = vmul.f32 %v1564, %v1720
      %v1732 = vmul.f32 %v1724, %v1680
      %v1733 = vmul.f32 %v1725, %v1686
      %v1734 = vmul.f32 %v1726, %v1692
      %v1735 = vmul.f32 %v1727, %v1698
      %v1736 = vmul.f32 %v1728, %v1704
      %v1737 = vmul.f32 %v1729, %v1710
      %v1738 = vmul.f32 %v1730, %v1716
      %v1739 = vmul.f32 %v1731, %v1722
      %v1740 = vld [vmem:[%s13] sm:$0xff]
      %v1741 = vld [vmem:[%s13 + $0x8] sm:$0xff]
      %v1742 = vld [vmem:[%s13 + $0x10] sm:$0xff]
      %v1743 = vld [vmem:[%s13 + $0x18] sm:$0xff]
      %v1744 = vld [vmem:[%s13 + $0x20] sm:$0xff]
      %v1745 = vld [vmem:[%s13 + $0x28] sm:$0xff]
      %vm1746 = vcmask 392192
      %v1748 = vsel %vm1746, %v1732, 0
      %v1751 = vsel %vm1746, %v1733, 0
      %v1754 = vsel %vm1746, %v1734, 0
      %v1757 = vsel %vm1746, %v1735, 0
      %v1760 = vsel %vm1746, %v1736, 0
      %v1763 = vsel %vm1746, %v1737, 0
      %v1766 = vsel %vm1746, %v1738, 0
      %v1769 = vsel %vm1746, %v1739, 0
      %1771 = vmatprep.subr.mxu0 0.0
      %1772 = vmatpush1.msra.mxu0 %v1740
      %1773 = vmatprep.subr.mxu0 0.0
      %1774 = vmatpush1.msra.mxu0 %v1741
      %1775 = vmatprep.subr.mxu0 0.0
      %1776 = vmatpush1.msra.mxu0 %v1742
      %1777 = vmatprep.subr.mxu0 0.0
      %1778 = vmatpush1.msra.mxu0 %v1743
      %1779 = vmatprep.subr.mxu0 0.0
      %1780 = vmatpush1.msra.mxu0 %v1744
      %1781 = vmatprep.subr.mxu0 0.0
      %1782 = vmatpush1.msra.mxu0 %v1745
      %1783 = vmatprep.subr.mxu0 0.0
      %1784 = vmatpush1.msra.mxu0 0.0
      %1785 = vmatprep.subr.mxu0 0.0
      %1786 = vmatpush1.msra.mxu0 0.0
      %1787 = vmatprep.subr.mxu0 0.0
      %1788 = vmatpush1.msra.mxu0 0.0
      %1789 = vmatprep.subr.mxu0 0.0
      %1790 = vmatpush1.msra.mxu0 0.0
      %1791 = vmatprep.subr.mxu0 0.0
      %1792 = vmatpush1.msra.mxu0 0.0
      %1793 = vmatprep.subr.mxu0 0.0
      %1794 = vmatpush1.msra.mxu0 0.0
      %1795 = vmatprep.subr.mxu0 0.0
      %1796 = vmatpush1.msra.mxu0 0.0
      %1797 = vmatprep.subr.mxu0 0.0
      %1798 = vmatpush1.msra.mxu0 0.0
      %1799 = vmatprep.subr.mxu0 0.0
      %1800 = vmatpush1.msra.mxu0 0.0
      %1801 = vmatprep.subr.mxu0 0.0
      %1802 = vmatpush1.msra.mxu0 0.0
      %1803 = vmatprep.subr.mxu0 0.0
      %1804 = vmatpush1.msra.mxu0 0.0
      %1805 = vmatprep.subr.mxu0 0.0
      %1806 = vmatpush1.msra.mxu0 0.0
      %1807 = vmatprep.subr.mxu0 0.0
      %1808 = vmatpush1.msra.mxu0 0.0
      %1809 = vmatprep.subr.mxu0 0.0
      %1810 = vmatpush1.msra.mxu0 0.0
      %1811 = vmatprep.subr.mxu0 0.0
      %1812 = vmatpush1.msra.mxu0 0.0
      %1813 = vmatprep.subr.mxu0 0.0
      %1814 = vmatpush1.msra.mxu0 0.0
      %1815 = vmatprep.subr.mxu0 0.0
      %1816 = vmatpush1.msra.mxu0 0.0
      %1817 = vmatprep.subr.mxu0 0.0
      %1818 = vmatpush1.msra.mxu0 0.0
      %1819 = vmatprep.subr.mxu0 0.0
      %1820 = vmatpush1.msra.mxu0 0.0
      %1821 = vmatprep.subr.mxu0 0.0
      %1822 = vmatpush1.msra.mxu0 0.0
      %1823 = vmatprep.subr.mxu0 0.0
      %1824 = vmatpush1.msra.mxu0 0.0
      %1825 = vmatprep.subr.mxu0 0.0
      %1826 = vmatpush1.msra.mxu0 0.0
      %1827 = vmatprep.subr.mxu0 0.0
      %1828 = vmatpush1.msra.mxu0 0.0
      %1829 = vmatprep.subr.mxu0 0.0
      %1830 = vmatpush1.msra.mxu0 0.0
      %1831 = vmatprep.subr.mxu0 0.0
      %1832 = vmatpush1.msra.mxu0 0.0
      %1833 = vmatprep.subr.mxu0 0.0
      %1834 = vmatpush1.msra.mxu0 0.0
      %1835 = vmatprep.mubr.f32.mxu0 0.0
      %1836 = vmatmul.mubr.f32.gmra.mrb[0].mxu0 %v1748
      %v1837 = vpop.f32.mrb[0].mxu0
      %v1838 = vadd.f32 0.0, %v1837
      %v1839 = vpop.f32.mrb[0].mxu0
      %1840 = vmatprep.mubr.f32.mxu0 0.0
      %1841 = vmatmul.mubr.f32.gmra.mrb[0].mxu0 %v1751
      %v1842 = vpop.f32.mrb[0].mxu0
      %v1843 = vadd.f32 0.0, %v1842
      %v1844 = vpop.f32.mrb[0].mxu0
      %1845 = vmatprep.mubr.f32.mxu0 0.0
      %1846 = vmatmul.mubr.f32.gmra.mrb[0].mxu0 %v1754
      %v1847 = vpop.f32.mrb[0].mxu0
      %v1848 = vadd.f32 0.0, %v1847
      %v1849 = vpop.f32.mrb[0].mxu0
      %1850 = vmatprep.mubr.f32.mxu0 0.0
      %1851 = vmatmul.mubr.f32.gmra.mrb[0].mxu0 %v1757
      %v1852 = vpop.f32.mrb[0].mxu0
      %v1853 = vadd.f32 0.0, %v1852
      %v1854 = vpop.f32.mrb[0].mxu0
      %1855 = vmatprep.mubr.f32.mxu0 0.0
      %1856 = vmatmul.mubr.f32.gmra.mrb[0].mxu0 %v1760
      %v1857 = vpop.f32.mrb[0].mxu0
      %v1858 = vadd.f32 0.0, %v1857
      %v1859 = vpop.f32.mrb[0].mxu0
      %1860 = vmatprep.mubr.f32.mxu0 0.0
      %1861 = vmatmul.mubr.f32.gmra.mrb[0].mxu0 %v1763
      %v1862 = vpop.f32.mrb[0].mxu0
      %v1863 = vadd.f32 0.0, %v1862
      %v1864 = vpop.f32.mrb[0].mxu0
      %1865 = vmatprep.mubr.f32.mxu0 0.0
      %1866 = vmatmul.mubr.f32.gmra.mrb[0].mxu0 %v1766
      %v1867 = vpop.f32.mrb[0].mxu0
      %v1868 = vadd.f32 0.0, %v1867
      %v1869 = vpop.f32.mrb[0].mxu0
      %1870 = vmatprep.mubr.f32.mxu0 0.0
      %1871 = vmatmul.mubr.f32.gmra.mrb[0].mxu0 %v1769
      %v1872 = vpop.f32.mrb[0].mxu0
      %v1873 = vadd.f32 0.0, %v1872
      %v1874 = vpop.f32.mrb[0].mxu0
      %1875 = vdwg.mxu0
      %vm1876 = vcmask 31744
      %1877 = vst.msk [vmem:[%s491] sm:$0xff] %vm1876, %v1838
      %1878 = vst.msk [vmem:[%s491 + $0x8] sm:$0xff] %vm1876, %v1843
      %1879 = vst.msk [vmem:[%s491 + $0x10] sm:$0xff] %vm1876, %v1848
      %1880 = vst.msk [vmem:[%s491 + $0x18] sm:$0xff] %vm1876, %v1853
      %1881 = vst.msk [vmem:[%s491 + $0x20] sm:$0xff] %vm1876, %v1858
      %1882 = vst.msk [vmem:[%s491 + $0x28] sm:$0xff] %vm1876, %v1863
      %1883 = vst.msk [vmem:[%s491 + $0x30] sm:$0xff] %vm1876, %v1868
      %1884 = vst.msk [vmem:[%s491 + $0x38] sm:$0xff] %vm1876, %v1873
      %s1885 = smul.u32 8, %s25
      %p1886 = scmp.lt.s32.totalorder %s1885, 15
      %s1887 = scalar_select %p1886, %s1885, 15
      %s1888 = smul.addr %s1887, 8
      %s1889 = scalar_lea.vmem %s14, %s1888
      // Predicated region
      $region77: #{tpu_custom_call.1} parent=75 // pred_check
        %p1890 = pneg %p347
      $region78: #{tpu_custom_call.1} parent=75 // pred_check_branch
        %1892 = sbr.rel (%p1890) target = $region80
      $region79: #{tpu_custom_call.1} parent=75 // pred_region
        %s1893 = smul.u32 8, %s25
      $region80: #{tpu_custom_call.1} parent=75 // pred_fallthru
        _
    $region76: #{tpu_custom_call.1} parent=5 // pred_fallthru
      _
    %p1894 = scmp.le.s32.totalorder 2, %s20
    // Predicated region
    $region81: #{tpu_custom_call.1} parent=5 // pred_check
      %p1895 = pneg %p1894
    $region82: #{tpu_custom_call.1} parent=5 // pred_check_branch
      %1897 = sbr.rel (%p1895) target = $region84
    $region83: #{tpu_custom_call.1} parent=5 // pred_region
      %s1898 = ssub.s32 %s20, 2
      // Predicated region
      $region85: #{tpu_custom_call.1} parent=83 // pred_check
        %p1899 = pneg %p353
      $region86: #{tpu_custom_call.1} parent=83 // pred_check_branch
        %1901 = sbr.rel (%p1899) target = $region88
      $region87: #{tpu_custom_call.1} parent=83 // pred_region
        %s1902 = smul.u32 8, %s26
        %p1903 = scmp.lt.s32.totalorder %s1902, 15
        %s1904 = scalar_select %p1903, %s1902, 15
        %s1905 = smul.addr %s1904, 8
        %s1906 = scalar_lea.vmem %s14, %s1905
      $region88: #{tpu_custom_call.1} parent=83 // pred_fallthru
        _
    $region84: #{tpu_custom_call.1} parent=5 // pred_fallthru
      _
  $region6: #{tpu_custom_call.1} parent=0 // loop_footer
    %s24 = sadd.s32 1, %s20
  $region7: #{tpu_custom_call.1} parent=0 // loop_footer_branch
    %19 = sbr.rel target = $region3
  $region8: #{tpu_custom_call.1} parent=0 // loop_exit
    _

</llo_original>
